<compile_context>
chip_gen: v7x
topology: tpu7x:2x2x1
jax: 0.10.0
libtpu: 0.0.40
codegen_flags: <defaults>
</compile_context>

<pallas_src>
import jax
import jax.numpy as jnp
from jax.experimental import pallas as pl
from jax.experimental.pallas import tpu as pltpu


def _round_up(x, m):
    return ((x + m - 1) // m) * m


def _mlp_kernel(x_ref, w1_ref, b1_ref, w2_ref, b2_ref, w3_ref, b3_ref, o_ref):
    # One (TB, D) tile of batch rows per grid step; all three layers fused in
    # VMEM so intermediates never touch HBM.  Weights are VMEM-resident
    # (constant index_map); only x and the (1, TB) output row stream via HBM.
    # Dot operands are bf16 (single MXU pass), accumulation and bias/ReLU f32.
    x = x_ref[...].astype(jnp.bfloat16)
    h1 = jnp.dot(x, w1_ref[...], preferred_element_type=jnp.float32) + b1_ref[...]
    h1 = jnp.maximum(h1, 0.0)                                  # ReLU (Dropout = id)
    h2 = jnp.dot(h1.astype(jnp.bfloat16), w2_ref[...],
                 preferred_element_type=jnp.float32) + b2_ref[...]
    h2 = jnp.maximum(h2, 0.0)                                  # ReLU
    # Final H->1 layer: VPU multiply + XLU lane reduction (MXU slot stays free),
    # stored lane-dense as a (1, TB) row.
    out = jnp.sum(h2 * w3_ref[...], axis=-1)                   # (TB,)
    o_ref[...] = (out[None, :] + b3_ref[...]).astype(o_ref.dtype)


def _prepare_params(params, h_align=8):
    """Zero-pad hidden to a multiple of `h_align` (exactly preserves the forward
    pass) and cast the two matmul weights to bf16 once.  Biases and the final
    H->1 weights stay f32."""
    w1, b1, w2, b2, w3, b3 = params
    H = w1.shape[1]
    Hp = max(h_align, _round_up(H, h_align))
    if Hp != H:
        p = Hp - H
        w1 = jnp.pad(w1, ((0, 0), (0, p)))
        b1 = jnp.pad(b1, ((0, 0), (0, p)))
        w2 = jnp.pad(w2, ((0, p), (0, p)))
        b2 = jnp.pad(b2, ((0, 0), (0, p)))
        w3 = jnp.pad(w3, ((0, p), (0, 0)))
    w3_row = jnp.reshape(w3, (1, Hp)).astype(jnp.float32)
    b3 = jnp.reshape(b3, (1, 1)).astype(jnp.float32)
    return (w1.astype(jnp.bfloat16), b1.astype(jnp.float32),
            w2.astype(jnp.bfloat16), b2.astype(jnp.float32),
            w3_row, b3)


def _choose_tile(B, tb_max):
    # Large tiles amortize the per-grid-step overhead; once the batch is big
    # enough, aim for >= 2 tiles so the "parallel" batch axis can feed both
    # TensorCores on v7x.  Always a multiple of 128 (lane-dense output row).
    if B >= 2048:
        tb = _round_up(pl.cdiv(B, 2), 128)
    else:
        tb = _round_up(B, 128)
    return max(128, min(tb, tb_max))


def mlp_forward(x_num, params, *, tb_max=8192):
    """x_num: (B, D) float32.  Returns (B,) float32 (== torch.squeeze of (B, 1))."""
    w1, b1, w2, b2, w3_row, b3 = _prepare_params(params)
    B, D = x_num.shape
    H = w1.shape[1]

    TB = _choose_tile(B, tb_max)
    n_tiles = pl.cdiv(B, TB)
    # No wrapper-side padding or casting of x: that would add a full extra HBM
    # pass over x.  Partial last block: OOB reads are row-independent garbage
    # and the matching output lanes never land in the (1, B) result.

    w_bytes = (w1.size + w2.size) * 2 + (b1.size + b2.size + w3_row.size + b3.size) * 4
    cost = pl.CostEstimate(
        flops=2 * B * (D * H + H * H + H),
        transcendentals=0,
        bytes_accessed=B * D * x_num.dtype.itemsize + w_bytes + B * 4,
    )

    # VMEM budget: 2x x tiles + 2x (1, TB) out rows + f32 h1/h2 temporaries +
    # weights, plus headroom; capped well under v7x's 64 MiB physical VMEM.
    vmem_est = 2 * TB * D * x_num.dtype.itemsize + 2 * TB * 4 + 6 * TB * H * 4 + w_bytes
    vmem_limit = int(min(_round_up(vmem_est + (4 << 20), 1 << 20), 48 << 20))

    out = pl.pallas_call(
        _mlp_kernel,
        out_shape=jax.ShapeDtypeStruct((1, B), jnp.float32),
        grid=(n_tiles,),
        in_specs=[
            pl.BlockSpec((TB, D), lambda i: (i, 0)),   # x: streamed per batch tile
            pl.BlockSpec((D, H), lambda i: (0, 0)),    # w1 (bf16): VMEM-resident
            pl.BlockSpec((1, H), lambda i: (0, 0)),    # b1 (f32)
            pl.BlockSpec((H, H), lambda i: (0, 0)),    # w2 (bf16)
            pl.BlockSpec((1, H), lambda i: (0, 0)),    # b2 (f32)
            pl.BlockSpec((1, H), lambda i: (0, 0)),    # w3 as f32 row
            pl.BlockSpec((1, 1), lambda i: (0, 0)),    # b3 (f32)
        ],
        out_specs=pl.BlockSpec((1, TB), lambda i: (0, i)),   # lane-dense output row
        compiler_params=pltpu.CompilerParams(
            dimension_semantics=("parallel",),   # shard batch tiles across TCs (v7x)
            vmem_limit_bytes=vmem_limit,
        ),
        cost_estimate=cost,
    )(x_num, w1, b1, w2, b2, w3_row, b3)

    return out[0]   # (B,): torch.squeeze comes for free from the lane-dense row


def init_params(key, src_num_dim, hidden):
    """Deterministic init mirroring nn.Linear's U(-1/sqrt(fan_in), 1/sqrt(fan_in))."""
    ks = jax.random.split(key, 6)

    def lin(kw, kb, fan_in, fan_out):
        bound = 1.0 / jnp.sqrt(fan_in)
        w = jax.random.uniform(kw, (fan_in, fan_out), jnp.float32, -bound, bound)
        b = jax.random.uniform(kb, (1, fan_out), jnp.float32, -bound, bound)
        return w, b

    w1, b1 = lin(ks[0], ks[1], src_num_dim, hidden)
    w2, b2 = lin(ks[2], ks[3], hidden, hidden)
    w3, b3 = lin(ks[4], ks[5], hidden, 1)
    return (w1, b1, w2, b2, w3, b3)


if __name__ == "__main__":
    key = jax.random.PRNGKey(0)
    k_x, k_p = jax.random.split(key)

    batch = 200          # deliberately not a multiple of 128: partial last block
    src_num_dim = 16
    hidden = 50          # nn.Module default; zero-padded to 56 inside the wrapper

    x_num = jax.random.normal(k_x, (batch, src_num_dim), jnp.float32)
    params = init_params(k_p, src_num_dim, hidden)

    y = mlp_forward(x_num, params)
    jax.block_until_ready(y)

    # Pure-JAX f32 reference of the same forward pass (bn=False, dropout=0).
    w1, b1, w2, b2, w3, b3 = params
    ref = jnp.maximum(x_num @ w1 + b1, 0.0)
    ref = jnp.maximum(ref @ w2 + b2, 0.0)
    ref = jnp.squeeze(ref @ w3 + b3)

    assert y.shape == (batch,)
    # bf16 MXU operands with f32 accumulation vs. an f32 reference.
    assert jnp.allclose(y, ref, atol=2e-2, rtol=2e-2), float(jnp.max(jnp.abs(y - ref)))

    # Multi-tile path (forced small tiles): several grid steps + partial last block.
    y2 = mlp_forward(x_num, params, tb_max=128)
    jax.block_until_ready(y2)
    assert jnp.allclose(y2, ref, atol=2e-2, rtol=2e-2)

    print("KERNEL_OK")
</pallas_src>

<mosaic_0001>
module attributes {stable_mosaic.version = 11 : i64} {
  func.func @_mlp_kernel(%arg0: i32, %arg1: memref<256x16xf32, #tpu.memory_space<vmem>>, %arg2: memref<16x56xbf16, #tpu.memory_space<vmem>>, %arg3: memref<1x56xf32, #tpu.memory_space<vmem>>, %arg4: memref<56x56xbf16, #tpu.memory_space<vmem>>, %arg5: memref<1x56xf32, #tpu.memory_space<vmem>>, %arg6: memref<1x56xf32, #tpu.memory_space<vmem>>, %arg7: memref<1x1xf32, #tpu.memory_space<vmem>>, %arg8: memref<1x256xf32, #tpu.memory_space<vmem>>) attributes {dimension_semantics = [#tpu.dimension_semantics<parallel>], iteration_bounds = array<i64: 1>, scalar_prefetch = 0 : i64, scratch_operands = 0 : i64, tpu.core_type = #tpu.core_type<tc>, window_params = [{transform_indices = @transform_0, window_bounds = array<i64: 256, 16>}, {pipeline_mode = #tpu.pipeline_mode<synchronous>, transform_indices = @transform_1, window_bounds = array<i64: 16, 56>}, {pipeline_mode = #tpu.pipeline_mode<synchronous>, transform_indices = @transform_2, window_bounds = array<i64: 1, 56>}, {pipeline_mode = #tpu.pipeline_mode<synchronous>, transform_indices = @transform_3, window_bounds = array<i64: 56, 56>}, {pipeline_mode = #tpu.pipeline_mode<synchronous>, transform_indices = @transform_4, window_bounds = array<i64: 1, 56>}, {pipeline_mode = #tpu.pipeline_mode<synchronous>, transform_indices = @transform_5, window_bounds = array<i64: 1, 56>}, {pipeline_mode = #tpu.pipeline_mode<synchronous>, transform_indices = @transform_6, window_bounds = array<i64: 1, 1>}, {transform_indices = @transform_7, window_bounds = array<i64: 1, 256>}]} {
    %c0 = arith.constant 0 : index
    %c0_0 = arith.constant 0 : index
    %0 = vector.load %arg1[%c0, %c0_0] : memref<256x16xf32, #tpu.memory_space<vmem>>, vector<256x16xf32>
    %1 = arith.truncf %0 : vector<256x16xf32> to vector<256x16xbf16>
    %c0_1 = arith.constant 0 : index
    %c0_2 = arith.constant 0 : index
    %2 = vector.load %arg2[%c0_1, %c0_2] : memref<16x56xbf16, #tpu.memory_space<vmem>>, vector<16x56xbf16>
    %cst = arith.constant dense<0.000000e+00> : vector<256x56xf32>
    %3 = tpu.matmul %1, %2, %cst {dimension_numbers = #tpu.dot_dimension_numbers<[1], [0], [0], [1], [0, 0, 1, 1], [], []>} : vector<256x16xbf16>, vector<16x56xbf16>, vector<256x56xf32> -> vector<256x56xf32>
    %c0_3 = arith.constant 0 : index
    %c0_4 = arith.constant 0 : index
    %4 = vector.load %arg3[%c0_3, %c0_4] : memref<1x56xf32, #tpu.memory_space<vmem>>, vector<1x56xf32>
    %5 = vector.broadcast %4 : vector<1x56xf32> to vector<256x56xf32>
    %6 = arith.addf %3, %5 : vector<256x56xf32>
    %cst_5 = arith.constant 0.000000e+00 : f32
    %7 = vector.broadcast %cst_5 : f32 to vector<256x56xf32>
    %8 = arith.maximumf %6, %7 : vector<256x56xf32>
    %9 = arith.truncf %8 : vector<256x56xf32> to vector<256x56xbf16>
    %c0_6 = arith.constant 0 : index
    %c0_7 = arith.constant 0 : index
    %10 = vector.load %arg4[%c0_6, %c0_7] : memref<56x56xbf16, #tpu.memory_space<vmem>>, vector<56x56xbf16>
    %cst_8 = arith.constant dense<0.000000e+00> : vector<256x56xf32>
    %11 = tpu.matmul %9, %10, %cst_8 {dimension_numbers = #tpu.dot_dimension_numbers<[1], [0], [0], [1], [0, 0, 1, 1], [], []>} : vector<256x56xbf16>, vector<56x56xbf16>, vector<256x56xf32> -> vector<256x56xf32>
    %c0_9 = arith.constant 0 : index
    %c0_10 = arith.constant 0 : index
    %12 = vector.load %arg5[%c0_9, %c0_10] : memref<1x56xf32, #tpu.memory_space<vmem>>, vector<1x56xf32>
    %13 = vector.broadcast %12 : vector<1x56xf32> to vector<256x56xf32>
    %14 = arith.addf %11, %13 : vector<256x56xf32>
    %cst_11 = arith.constant 0.000000e+00 : f32
    %15 = vector.broadcast %cst_11 : f32 to vector<256x56xf32>
    %16 = arith.maximumf %14, %15 : vector<256x56xf32>
    %c0_12 = arith.constant 0 : index
    %c0_13 = arith.constant 0 : index
    %17 = vector.load %arg6[%c0_12, %c0_13] : memref<1x56xf32, #tpu.memory_space<vmem>>, vector<1x56xf32>
    %18 = vector.broadcast %17 : vector<1x56xf32> to vector<256x56xf32>
    %19 = arith.mulf %16, %18 : vector<256x56xf32>
    %cst_14 = arith.constant dense<0.000000e+00> : vector<256xf32>
    %20 = vector.multi_reduction <add>, %19, %cst_14 [1] : vector<256x56xf32> to vector<256xf32>
    %21 = vector.shape_cast %20 : vector<256xf32> to vector<1x256xf32>
    %c0_15 = arith.constant 0 : index
    %c0_16 = arith.constant 0 : index
    %22 = vector.load %arg7[%c0_15, %c0_16] : memref<1x1xf32, #tpu.memory_space<vmem>>, vector<1x1xf32>
    %23 = vector.broadcast %22 : vector<1x1xf32> to vector<1x256xf32>
    %24 = arith.addf %21, %23 : vector<1x256xf32>
    %c0_17 = arith.constant 0 : index
    %c0_18 = arith.constant 0 : index
    %25 = vector.load %arg8[%c0_17, %c0_18] : memref<1x256xf32, #tpu.memory_space<vmem>>, vector<1x256xf32>
    tpu.vector_store %arg8[%c0_17, %c0_18], %24 {strides = array<i32>} : memref<1x256xf32, #tpu.memory_space<vmem>>, vector<1x256xf32>,
    return
  }
  func.func @transform_0(%arg0: i32) -> (i32, i32) {
    %c0_i32 = arith.constant 0 : i32
    %c0_i32_0 = arith.constant 0 : i32
    return %arg0, %c0_i32 : i32, i32
  }
  func.func @transform_1(%arg0: i32) -> (i32, i32) {
    %c0_i32 = arith.constant 0 : i32
    %c0_i32_0 = arith.constant 0 : i32
    %c0_i32_1 = arith.constant 0 : i32
    return %c0_i32, %c0_i32_0 : i32, i32
  }
  func.func @transform_2(%arg0: i32) -> (i32, i32) {
    %c0_i32 = arith.constant 0 : i32
    %c0_i32_0 = arith.constant 0 : i32
    %c0_i32_1 = arith.constant 0 : i32
    return %c0_i32, %c0_i32_0 : i32, i32
  }
  func.func @transform_3(%arg0: i32) -> (i32, i32) {
    %c0_i32 = arith.constant 0 : i32
    %c0_i32_0 = arith.constant 0 : i32
    %c0_i32_1 = arith.constant 0 : i32
    return %c0_i32, %c0_i32_0 : i32, i32
  }
  func.func @transform_4(%arg0: i32) -> (i32, i32) {
    %c0_i32 = arith.constant 0 : i32
    %c0_i32_0 = arith.constant 0 : i32
    %c0_i32_1 = arith.constant 0 : i32
    return %c0_i32, %c0_i32_0 : i32, i32
  }
  func.func @transform_5(%arg0: i32) -> (i32, i32) {
    %c0_i32 = arith.constant 0 : i32
    %c0_i32_0 = arith.constant 0 : i32
    %c0_i32_1 = arith.constant 0 : i32
    return %c0_i32, %c0_i32_0 : i32, i32
  }
  func.func @transform_6(%arg0: i32) -> (i32, i32) {
    %c0_i32 = arith.constant 0 : i32
    %c0_i32_0 = arith.constant 0 : i32
    %c0_i32_1 = arith.constant 0 : i32
    return %c0_i32, %c0_i32_0 : i32, i32
  }
  func.func @transform_7(%arg0: i32) -> (i32, i32) {
    %c0_i32 = arith.constant 0 : i32
    %c0_i32_0 = arith.constant 0 : i32
    return %c0_i32, %arg0 : i32, i32
  }
}

</mosaic_0001>

<llo_original>
// kernel: tpu_custom_call.1
$region0: #{tpu_custom_call.1}
  #allocation0 [shape = 'u32[]', space=smem, size = 0x4, offset = 0x4, fixed_abs, tag = 'smem constant byte address 0x4 - core index']
  #allocation1 [shape = 'u32[144,128]{1,0:T(1,128)}', space=vmem, size = 0x12000, scoped, tag = 'internal scratch']
  #allocation2 [shape = 'f32[1,1]{1,0:T(1,128)S(1)}', space=vmem, size = 0x200, scoped, tag = 'scoped memory for tpu_custom_call.1']
  %s0 = inlined_call_operand.vmem [shape: f32[200,16], index: 0, kind: input, shape index: {}]
  %s1 = inlined_call_operand.vmem [shape: bf16[16,56], index: 1, kind: input, shape index: {}]
  %s2 = inlined_call_operand.vmem [shape: f32[1,56], index: 2, kind: input, shape index: {}]
  %s3 = inlined_call_operand.vmem [shape: bf16[56,56], index: 3, kind: input, shape index: {}]
  %s4 = inlined_call_operand.vmem [shape: f32[1,56], index: 4, kind: input, shape index: {}]
  %s5 = inlined_call_operand.vmem [shape: f32[1,56], index: 5, kind: input, shape index: {}]
  %s6 = inlined_call_operand.<no memory space> [shape: f32[1,1], index: 6, kind: input, shape index: {}]
  %s7 = inlined_call_operand.hbm [shape: f32[1,200], index: 7, kind: output, shape index: {}]
  %s8 = sld [smem:[#allocation0]]
  $region38: #{tpu_custom_call.1} parent=0
    _
  %s10 = ssub.s32 1, %s8
  %s11 = scalar_select 0, %s10, %s8
  %v12 = vstv %s6
  %13 = vst [vmem:[#allocation2] sm:$0x1] %v12
  $region1: #{tpu_custom_call.1} parent=0
    #allocation3 [shape = 'u8[1024]{0}', space=vmem, size = 0x400, scoped, tag = 'output window, operand 0, single buffered']
    #allocation4 [shape = 's32[1]{0}', space=sflag, size = 0x4, scoped, tag = 'scoped memory for tpu_custom_call.1']
    %14 = vsyncpa [#allocation4], 0
    // Predicated region
    $region2: #{tpu_custom_call.1} parent=1 // pred_check
      _
    $region3: #{tpu_custom_call.1} parent=1 // pred_check_branch
      %16 = sbr.rel (0) target = $region5
    $region4: #{tpu_custom_call.1} parent=1 // pred_region
      _
    $region5: #{tpu_custom_call.1} parent=1 // pred_fallthru
      _
    // Predicated region
    $region6: #{tpu_custom_call.1} parent=1 // pred_check
      _
    $region7: #{tpu_custom_call.1} parent=1 // pred_check_branch
      %18 = sbr.rel (0) target = $region9
    $region8: #{tpu_custom_call.1} parent=1 // pred_region
      _
    $region9: #{tpu_custom_call.1} parent=1 // pred_fallthru
      _
    // Predicated region
    $region10: #{tpu_custom_call.1} parent=1 // pred_check
      _
    $region11: #{tpu_custom_call.1} parent=1 // pred_check_branch
      %20 = sbr.rel (0) target = $region13
    $region12: #{tpu_custom_call.1} parent=1 // pred_region
      _
    $region13: #{tpu_custom_call.1} parent=1 // pred_fallthru
      _
    // Predicated region
    $region14: #{tpu_custom_call.1} parent=1 // pred_check
      _
    $region15: #{tpu_custom_call.1} parent=1 // pred_check_branch
      %22 = sbr.rel (0) target = $region17
    $region16: #{tpu_custom_call.1} parent=1 // pred_region
      _
    $region17: #{tpu_custom_call.1} parent=1 // pred_fallthru
      _
    // Predicated region
    $region18: #{tpu_custom_call.1} parent=1 // pred_check
      _
    $region19: #{tpu_custom_call.1} parent=1 // pred_check_branch
      %24 = sbr.rel (0) target = $region21
    $region20: #{tpu_custom_call.1} parent=1 // pred_region
      _
    $region21: #{tpu_custom_call.1} parent=1 // pred_fallthru
      _
    // Predicated region
    $region22: #{tpu_custom_call.1} parent=1 // pred_check
      _
    $region23: #{tpu_custom_call.1} parent=1 // pred_check_branch
      %26 = sbr.rel (0) target = $region25
    $region24: #{tpu_custom_call.1} parent=1 // pred_region
      _
    $region25: #{tpu_custom_call.1} parent=1 // pred_fallthru
      _
    // Predicated region
    $region26: #{tpu_custom_call.1} parent=1 // pred_check
      _
    $region27: #{tpu_custom_call.1} parent=1 // pred_check_branch
      %28 = sbr.rel (0) target = $region29
    $region28: #{tpu_custom_call.1} parent=1 // pred_region
      _
    $region29: #{tpu_custom_call.1} parent=1 // pred_fallthru
      _
    %v30 = vld [vmem:[%s0] sm:$0xff]
    %v31 = vld [vmem:[%s0 + $0x8] sm:$0xff]
    %v32 = vld [vmem:[%s0 + $0x10] sm:$0xff]
    %v33 = vld [vmem:[%s0 + $0x18] sm:$0xff]
    %v34 = vld [vmem:[%s0 + $0x20] sm:$0xff]
    %v35 = vld [vmem:[%s0 + $0x28] sm:$0xff]
    %v36 = vld [vmem:[%s0 + $0x30] sm:$0xff]
    %v37 = vld [vmem:[%s0 + $0x38] sm:$0xff]
    %v38 = vld [vmem:[%s0 + $0x40] sm:$0xff]
    %v39 = vld [vmem:[%s0 + $0x48] sm:$0xff]
    %v40 = vld [vmem:[%s0 + $0x50] sm:$0xff]
    %v41 = vld [vmem:[%s0 + $0x58] sm:$0xff]
    %v42 = vld [vmem:[%s0 + $0x60] sm:$0xff]
    %v43 = vld [vmem:[%s0 + $0x68] sm:$0xff]
    %v44 = vld [vmem:[%s0 + $0x70] sm:$0xff]
    %v45 = vld [vmem:[%s0 + $0x78] sm:$0xff]
    %v46 = vld [vmem:[%s0 + $0x80] sm:$0xff]
    %v47 = vld [vmem:[%s0 + $0x88] sm:$0xff]
    %v48 = vld [vmem:[%s0 + $0x90] sm:$0xff]
    %v49 = vld [vmem:[%s0 + $0x98] sm:$0xff]
    %v50 = vld [vmem:[%s0 + $0xa0] sm:$0xff]
    %v51 = vld [vmem:[%s0 + $0xa8] sm:$0xff]
    %v52 = vld [vmem:[%s0 + $0xb0] sm:$0xff]
    %v53 = vld [vmem:[%s0 + $0xb8] sm:$0xff]
    %v54 = vld [vmem:[%s0 + $0xc0] sm:$0xff]
    %v55 = vld [vmem:[%s0 + $0xc8] sm:$0xff]
    %v56 = vld [vmem:[%s0 + $0xd0] sm:$0xff]
    %v57 = vld [vmem:[%s0 + $0xd8] sm:$0xff]
    %v58 = vld [vmem:[%s0 + $0xe0] sm:$0xff]
    %v59 = vld [vmem:[%s0 + $0xe8] sm:$0xff]
    %v60 = vld [vmem:[%s0 + $0xf0] sm:$0xff]
    %v61 = vld [vmem:[%s0 + $0xf8] sm:$0xff]
    %v62 = vpack.c.bf16 %v31, %v30
    %v63 = vpack.c.bf16 %v33, %v32
    %v64 = vpack.c.bf16 %v35, %v34
    %v65 = vpack.c.bf16 %v37, %v36
    %v66 = vpack.c.bf16 %v39, %v38
    %v67 = vpack.c.bf16 %v41, %v40
    %v68 = vpack.c.bf16 %v43, %v42
    %v69 = vpack.c.bf16 %v45, %v44
    %v70 = vpack.c.bf16 %v47, %v46
    %v71 = vpack.c.bf16 %v49, %v48
    %v72 = vpack.c.bf16 %v51, %v50
    %v73 = vpack.c.bf16 %v53, %v52
    %v74 = vpack.c.bf16 %v55, %v54
    %v75 = vpack.c.bf16 %v57, %v56
    %v76 = vpack.c.bf16 %v59, %v58
    %v77 = vpack.c.bf16 %v61, %v60
    %v78 = vld [vmem:[%s1] sm:$0xf]
    %v79 = vld [vmem:[%s1 + $0x4] sm:$0xf]
    %v80 = vld [vmem:[%s2] sm:$0x1]
    %v82 = vlaneseq
    %v83 = vshrl.u32 %v82, 7
    %v84 = vsub.s32 0, %v83
    %v85 = vrot.slane %v80, %v84
    %v89 = vunpack.c.l.b16 %v78
    %v90 = vunpack.c.l.b16 %v79
    %v91 = vpack.c.b16 %v90, %v89
    %vm93 = vcmask 130048
    %v95 = vsel %vm93, %v62, 0
    %v98 = vsel %vm93, %v63, 0
    %v101 = vsel %vm93, %v64, 0
    %v104 = vsel %vm93, %v65, 0
    %v107 = vsel %vm93, %v66, 0
    %v110 = vsel %vm93, %v67, 0
    %v113 = vsel %vm93, %v68, 0
    %v116 = vsel %vm93, %v69, 0
    %v119 = vsel %vm93, %v70, 0
    %v122 = vsel %vm93, %v71, 0
    %v125 = vsel %vm93, %v72, 0
    %v128 = vsel %vm93, %v73, 0
    %v131 = vsel %vm93, %v74, 0
    %v134 = vsel %vm93, %v75, 0
    %v137 = vsel %vm93, %v76, 0
    %v140 = vsel %vm93, %v77, 0
    %142 = vmatprep.subr.bf16.mxu0 0
    %143 = vmatpush1.bf16.msra.mxu0 %v91
    %144 = vmatprep.subr.bf16.mxu0 0
    %145 = vmatpush1.bf16.msra.mxu0 0
    %146 = vmatprep.subr.bf16.mxu0 0
    %147 = vmatpush1.bf16.msra.mxu0 0
    %148 = vmatprep.subr.bf16.mxu0 0
    %149 = vmatpush1.bf16.msra.mxu0 0
    %150 = vmatprep.subr.bf16.mxu0 0
    %151 = vmatpush1.bf16.msra.mxu0 0
    %152 = vmatprep.subr.bf16.mxu0 0
    %153 = vmatpush1.bf16.msra.mxu0 0
    %154 = vmatprep.subr.bf16.mxu0 0
    %155 = vmatpush1.bf16.msra.mxu0 0
    %156 = vmatprep.subr.bf16.mxu0 0
    %157 = vmatpush1.bf16.msra.mxu0 0
    %158 = vmatprep.subr.bf16.mxu0 0
    %159 = vmatpush1.bf16.msra.mxu0 0
    %160 = vmatprep.subr.bf16.mxu0 0
    %161 = vmatpush1.bf16.msra.mxu0 0
    %162 = vmatprep.subr.bf16.mxu0 0
    %163 = vmatpush1.bf16.msra.mxu0 0
    %164 = vmatprep.subr.bf16.mxu0 0
    %165 = vmatpush1.bf16.msra.mxu0 0
    %166 = vmatprep.subr.bf16.mxu0 0
    %167 = vmatpush1.bf16.msra.mxu0 0
    %168 = vmatprep.subr.bf16.mxu0 0
    %169 = vmatpush1.bf16.msra.mxu0 0
    %170 = vmatprep.subr.bf16.mxu0 0
    %171 = vmatpush1.bf16.msra.mxu0 0
    %172 = vmatprep.subr.bf16.mxu0 0
    %173 = vmatpush1.bf16.msra.mxu0 0
    %174 = vmatprep.mubr.bf16.mxu0 0
    %175 = vmatmul.mubr.bf16.gmra.mrb[0].mxu0 %v95
    %v176 = vpop.f32.mrb[0].mxu0
    %v177 = vadd.f32 %v85, %v176
    %v178 = vpop.f32.mrb[0].mxu0
    %v179 = vpop.f32.mrb[0].mxu0
    %v180 = vadd.f32 %v85, %v179
    %v181 = vpop.f32.mrb[0].mxu0
    %182 = vmatprep.mubr.bf16.mxu0 0
    %183 = vmatmul.mubr.bf16.gmra.mrb[0].mxu0 %v98
    %v184 = vpop.f32.mrb[0].mxu0
    %v185 = vadd.f32 %v85, %v184
    %v186 = vpop.f32.mrb[0].mxu0
    %v187 = vpop.f32.mrb[0].mxu0
    %v188 = vadd.f32 %v85, %v187
    %v189 = vpop.f32.mrb[0].mxu0
    %190 = vmatprep.mubr.bf16.mxu0 0
    %191 = vmatmul.mubr.bf16.gmra.mrb[0].mxu0 %v101
    %v192 = vpop.f32.mrb[0].mxu0
    %v193 = vadd.f32 %v85, %v192
    %v194 = vpop.f32.mrb[0].mxu0
    %v195 = vpop.f32.mrb[0].mxu0
    %v196 = vadd.f32 %v85, %v195
    %v197 = vpop.f32.mrb[0].mxu0
    %198 = vmatprep.mubr.bf16.mxu0 0
    %199 = vmatmul.mubr.bf16.gmra.mrb[0].mxu0 %v104
    %v200 = vpop.f32.mrb[0].mxu0
    %v201 = vadd.f32 %v85, %v200
    %v202 = vpop.f32.mrb[0].mxu0
    %v203 = vpop.f32.mrb[0].mxu0
    %v204 = vadd.f32 %v85, %v203
    %v205 = vpop.f32.mrb[0].mxu0
    %206 = vmatprep.mubr.bf16.mxu0 0
    %207 = vmatmul.mubr.bf16.gmra.mrb[0].mxu0 %v107
    %v208 = vpop.f32.mrb[0].mxu0
    %v209 = vadd.f32 %v85, %v208
    %v210 = vpop.f32.mrb[0].mxu0
    %v211 = vpop.f32.mrb[0].mxu0
    %v212 = vadd.f32 %v85, %v211
    %v213 = vpop.f32.mrb[0].mxu0
    %214 = vmatprep.mubr.bf16.mxu0 0
    %215 = vmatmul.mubr.bf16.gmra.mrb[0].mxu0 %v110
    %v216 = vpop.f32.mrb[0].mxu0
    %v217 = vadd.f32 %v85, %v216
    %v218 = vpop.f32.mrb[0].mxu0
    %v219 = vpop.f32.mrb[0].mxu0
    %v220 = vadd.f32 %v85, %v219
    %v221 = vpop.f32.mrb[0].mxu0
    %222 = vmatprep.mubr.bf16.mxu0 0
    %223 = vmatmul.mubr.bf16.gmra.mrb[0].mxu0 %v113
    %v224 = vpop.f32.mrb[0].mxu0
    %v225 = vadd.f32 %v85, %v224
    %v226 = vpop.f32.mrb[0].mxu0
    %v227 = vpop.f32.mrb[0].mxu0
    %v228 = vadd.f32 %v85, %v227
    %v229 = vpop.f32.mrb[0].mxu0
    %230 = vmatprep.mubr.bf16.mxu0 0
    %231 = vmatmul.mubr.bf16.gmra.mrb[0].mxu0 %v116
    %v232 = vpop.f32.mrb[0].mxu0
    %v233 = vadd.f32 %v85, %v232
    %v234 = vpop.f32.mrb[0].mxu0
    %v235 = vpop.f32.mrb[0].mxu0
    %v236 = vadd.f32 %v85, %v235
    %v237 = vpop.f32.mrb[0].mxu0
    %238 = vmatprep.mubr.bf16.mxu0 0
    %239 = vmatmul.mubr.bf16.gmra.mrb[0].mxu0 %v119
    %v240 = vpop.f32.mrb[0].mxu0
    %v241 = vadd.f32 %v85, %v240
    %v242 = vpop.f32.mrb[0].mxu0
    %v243 = vpop.f32.mrb[0].mxu0
    %v244 = vadd.f32 %v85, %v243
    %v245 = vpop.f32.mrb[0].mxu0
    %246 = vmatprep.mubr.bf16.mxu0 0
    %247 = vmatmul.mubr.bf16.gmra.mrb[0].mxu0 %v122
    %v248 = vpop.f32.mrb[0].mxu0
    %v249 = vadd.f32 %v85, %v248
    %v250 = vpop.f32.mrb[0].mxu0
    %v251 = vpop.f32.mrb[0].mxu0
    %v252 = vadd.f32 %v85, %v251
    %v253 = vpop.f32.mrb[0].mxu0
    %254 = vmatprep.mubr.bf16.mxu0 0
    %255 = vmatmul.mubr.bf16.gmra.mrb[0].mxu0 %v125
    %v256 = vpop.f32.mrb[0].mxu0
    %v257 = vadd.f32 %v85, %v256
    %v258 = vpop.f32.mrb[0].mxu0
    %v259 = vpop.f32.mrb[0].mxu0
    %v260 = vadd.f32 %v85, %v259
    %v261 = vpop.f32.mrb[0].mxu0
    %262 = vmatprep.mubr.bf16.mxu0 0
    %263 = vmatmul.mubr.bf16.gmra.mrb[0].mxu0 %v128
    %v264 = vpop.f32.mrb[0].mxu0
    %v265 = vadd.f32 %v85, %v264
    %v266 = vpop.f32.mrb[0].mxu0
    %v267 = vpop.f32.mrb[0].mxu0
    %v268 = vadd.f32 %v85, %v267
    %v269 = vpop.f32.mrb[0].mxu0
    %270 = vmatprep.mubr.bf16.mxu0 0
    %271 = vmatmul.mubr.bf16.gmra.mrb[0].mxu0 %v131
    %v272 = vpop.f32.mrb[0].mxu0
    %v273 = vadd.f32 %v85, %v272
    %v274 = vpop.f32.mrb[0].mxu0
    %v275 = vpop.f32.mrb[0].mxu0
    %v276 = vadd.f32 %v85, %v275
    %v277 = vpop.f32.mrb[0].mxu0
    %278 = vmatprep.mubr.bf16.mxu0 0
    %279 = vmatmul.mubr.bf16.gmra.mrb[0].mxu0 %v134
    %v280 = vpop.f32.mrb[0].mxu0
    %v281 = vadd.f32 %v85, %v280
    %v282 = vpop.f32.mrb[0].mxu0
    %v283 = vpop.f32.mrb[0].mxu0
    %v284 = vadd.f32 %v85, %v283
    %v285 = vpop.f32.mrb[0].mxu0
    %286 = vmatprep.mubr.bf16.mxu0 0
    %287 = vmatmul.mubr.bf16.gmra.mrb[0].mxu0 %v137
    %v288 = vpop.f32.mrb[0].mxu0
    %v289 = vadd.f32 %v85, %v288
    %v290 = vpop.f32.mrb[0].mxu0
    %v291 = vpop.f32.mrb[0].mxu0
    %v292 = vadd.f32 %v85, %v291
    %v293 = vpop.f32.mrb[0].mxu0
    %294 = vmatprep.mubr.bf16.mxu0 0
    %295 = vmatmul.mubr.bf16.gmra.mrb[0].mxu0 %v140
    %v296 = vpop.f32.mrb[0].mxu0
    %v297 = vadd.f32 %v85, %v296
    %v298 = vpop.f32.mrb[0].mxu0
    %v299 = vpop.f32.mrb[0].mxu0
    %v300 = vadd.f32 %v85, %v299
    %v301 = vpop.f32.mrb[0].mxu0
    %302 = vdwg.mxu0
    %v303 = vmax.f32 %v177, 0.0
    %v304 = vmax.f32 %v180, 0.0
    %v305 = vmax.f32 %v185, 0.0
    %v306 = vmax.f32 %v188, 0.0
    %v307 = vmax.f32 %v193, 0.0
    %v308 = vmax.f32 %v196, 0.0
    %v309 = vmax.f32 %v201, 0.0
    %v310 = vmax.f32 %v204, 0.0
    %v311 = vmax.f32 %v209, 0.0
    %v312 = vmax.f32 %v212, 0.0
    %v313 = vmax.f32 %v217, 0.0
    %v314 = vmax.f32 %v220, 0.0
    %v315 = vmax.f32 %v225, 0.0
    %v316 = vmax.f32 %v228, 0.0
    %v317 = vmax.f32 %v233, 0.0
    %v318 = vmax.f32 %v236, 0.0
    %v319 = vmax.f32 %v241, 0.0
    %v320 = vmax.f32 %v244, 0.0
    %v321 = vmax.f32 %v249, 0.0
    %v322 = vmax.f32 %v252, 0.0
    %v323 = vmax.f32 %v257, 0.0
    %v324 = vmax.f32 %v260, 0.0
    %v325 = vmax.f32 %v265, 0.0
    %v326 = vmax.f32 %v268, 0.0
    %v327 = vmax.f32 %v273, 0.0
    %v328 = vmax.f32 %v276, 0.0
    %v329 = vmax.f32 %v281, 0.0
    %v330 = vmax.f32 %v284, 0.0
    %v331 = vmax.f32 %v289, 0.0
    %v332 = vmax.f32 %v292, 0.0
    %v333 = vmax.f32 %v297, 0.0
    %v334 = vmax.f32 %v300, 0.0
    %v335 = vpack.c.bf16 %v304, %v303
    %v336 = vpack.c.bf16 %v306, %v305
    %v337 = vpack.c.bf16 %v308, %v307
    %v338 = vpack.c.bf16 %v310, %v309
    %v339 = vpack.c.bf16 %v312, %v311
    %v340 = vpack.c.bf16 %v314, %v313
    %v341 = vpack.c.bf16 %v316, %v315
    %v342 = vpack.c.bf16 %v318, %v317
    %v343 = vpack.c.bf16 %v320, %v319
    %v344 = vpack.c.bf16 %v322, %v321
    %v345 = vpack.c.bf16 %v324, %v323
    %v346 = vpack.c.bf16 %v326, %v325
    %v347 = vpack.c.bf16 %v328, %v327
    %v348 = vpack.c.bf16 %v330, %v329
    %v349 = vpack.c.bf16 %v332, %v331
    %v350 = vpack.c.bf16 %v334, %v333
    %v351 = vld [vmem:[%s3] sm:$0xf]
    %v352 = vld [vmem:[%s3 + $0x4] sm:$0xf]
    %v353 = vld [vmem:[%s3 + $0x8] sm:$0xf]
    %v354 = vld [vmem:[%s3 + $0xc] sm:$0xf]
    %v355 = vld [vmem:[%s3 + $0x10] sm:$0xf]
    %v356 = vld [vmem:[%s3 + $0x14] sm:$0xf]
    %v357 = vld [vmem:[%s3 + $0x18] sm:$0xf]
    %v358 = vld [vmem:[%s4] sm:$0x1]
    %v360 = vlaneseq
    %v361 = vshrl.u32 %v360, 7
    %v362 = vsub.s32 0, %v361
    %v363 = vrot.slane %v358, %v362
    %v372 = vunpack.c.l.b16 %v351
    %v373 = vunpack.c.l.b16 %v352
    %v374 = vunpack.c.l.b16 %v353
    %v375 = vunpack.c.l.b16 %v354
    %v376 = vunpack.c.l.b16 %v355
    %v377 = vunpack.c.l.b16 %v356
    %v378 = vunpack.c.l.b16 %v357
    %v379 = vpack.c.b16 %v373, %v372
    %v380 = vpack.c.b16 %v375, %v374
    %v381 = vpack.c.b16 %v377, %v376
    %v382 = vpack.c.b16 %v378, %v378
    %vm386 = vcmask 457728
    %v388 = vsel %vm386, %v335, 0
    %v391 = vsel %vm386, %v336, 0
    %v394 = vsel %vm386, %v337, 0
    %v397 = vsel %vm386, %v338, 0
    %v400 = vsel %vm386, %v339, 0
    %v403 = vsel %vm386, %v340, 0
    %v406 = vsel %vm386, %v341, 0
    %v409 = vsel %vm386, %v342, 0
    %v412 = vsel %vm386, %v343, 0
    %v415 = vsel %vm386, %v344, 0
    %v418 = vsel %vm386, %v345, 0
    %v421 = vsel %vm386, %v346, 0
    %v424 = vsel %vm386, %v347, 0
    %v427 = vsel %vm386, %v348, 0
    %v430 = vsel %vm386, %v349, 0
    %v433 = vsel %vm386, %v350, 0
    %vm435 = vcmask 1043456
    %v437 = vsel %vm435, %v382, 0
    %439 = vmatprep.subr.bf16.mxu0 0
    %440 = vmatpush1.bf16.msra.mxu0 %v379
    %441 = vmatprep.subr.bf16.mxu0 0
    %442 = vmatpush1.bf16.msra.mxu0 %v380
    %443 = vmatprep.subr.bf16.mxu0 0
    %444 = vmatpush1.bf16.msra.mxu0 %v381
    %445 = vmatprep.subr.bf16.mxu0 0
    %446 = vmatpush1.bf16.msra.mxu0 %v437
    %447 = vmatprep.subr.bf16.mxu0 0
    %448 = vmatpush1.bf16.msra.mxu0 0
    %449 = vmatprep.subr.bf16.mxu0 0
    %450 = vmatpush1.bf16.msra.mxu0 0
    %451 = vmatprep.subr.bf16.mxu0 0
    %452 = vmatpush1.bf16.msra.mxu0 0
    %453 = vmatprep.subr.bf16.mxu0 0
    %454 = vmatpush1.bf16.msra.mxu0 0
    %455 = vmatprep.subr.bf16.mxu0 0
    %456 = vmatpush1.bf16.msra.mxu0 0
    %457 = vmatprep.subr.bf16.mxu0 0
    %458 = vmatpush1.bf16.msra.mxu0 0
    %459 = vmatprep.subr.bf16.mxu0 0
    %460 = vmatpush1.bf16.msra.mxu0 0
    %461 = vmatprep.subr.bf16.mxu0 0
    %462 = vmatpush1.bf16.msra.mxu0 0
    %463 = vmatprep.subr.bf16.mxu0 0
    %464 = vmatpush1.bf16.msra.mxu0 0
    %465 = vmatprep.subr.bf16.mxu0 0
    %466 = vmatpush1.bf16.msra.mxu0 0
    %467 = vmatprep.subr.bf16.mxu0 0
    %468 = vmatpush1.bf16.msra.mxu0 0
    %469 = vmatprep.subr.bf16.mxu0 0
    %470 = vmatpush1.bf16.msra.mxu0 0
    %471 = vmatprep.mubr.bf16.mxu0 0
    %472 = vmatmul.mubr.bf16.gmra.mrb[0].mxu0 %v388
    %v473 = vpop.f32.mrb[0].mxu0
    %v474 = vadd.f32 %v363, %v473
    %v475 = vpop.f32.mrb[0].mxu0
    %v476 = vpop.f32.mrb[0].mxu0
    %v477 = vadd.f32 %v363, %v476
    %v478 = vpop.f32.mrb[0].mxu0
    %479 = vmatprep.mubr.bf16.mxu0 0
    %480 = vmatmul.mubr.bf16.gmra.mrb[0].mxu0 %v391
    %v481 = vpop.f32.mrb[0].mxu0
    %v482 = vadd.f32 %v363, %v481
    %v483 = vpop.f32.mrb[0].mxu0
    %v484 = vpop.f32.mrb[0].mxu0
    %v485 = vadd.f32 %v363, %v484
    %v486 = vpop.f32.mrb[0].mxu0
    %487 = vmatprep.mubr.bf16.mxu0 0
    %488 = vmatmul.mubr.bf16.gmra.mrb[0].mxu0 %v394
    %v489 = vpop.f32.mrb[0].mxu0
    %v490 = vadd.f32 %v363, %v489
    %v491 = vpop.f32.mrb[0].mxu0
    %v492 = vpop.f32.mrb[0].mxu0
    %v493 = vadd.f32 %v363, %v492
    %v494 = vpop.f32.mrb[0].mxu0
    %495 = vmatprep.mubr.bf16.mxu0 0
    %496 = vmatmul.mubr.bf16.gmra.mrb[0].mxu0 %v397
    %v497 = vpop.f32.mrb[0].mxu0
    %v498 = vadd.f32 %v363, %v497
    %v499 = vpop.f32.mrb[0].mxu0
    %v500 = vpop.f32.mrb[0].mxu0
    %v501 = vadd.f32 %v363, %v500
    %v502 = vpop.f32.mrb[0].mxu0
    %503 = vmatprep.mubr.bf16.mxu0 0
    %504 = vmatmul.mubr.bf16.gmra.mrb[0].mxu0 %v400
    %v505 = vpop.f32.mrb[0].mxu0
    %v506 = vadd.f32 %v363, %v505
    %v507 = vpop.f32.mrb[0].mxu0
    %v508 = vpop.f32.mrb[0].mxu0
    %v509 = vadd.f32 %v363, %v508
    %v510 = vpop.f32.mrb[0].mxu0
    %511 = vmatprep.mubr.bf16.mxu0 0
    %512 = vmatmul.mubr.bf16.gmra.mrb[0].mxu0 %v403
    %v513 = vpop.f32.mrb[0].mxu0
    %v514 = vadd.f32 %v363, %v513
    %v515 = vpop.f32.mrb[0].mxu0
    %v516 = vpop.f32.mrb[0].mxu0
    %v517 = vadd.f32 %v363, %v516
    %v518 = vpop.f32.mrb[0].mxu0
    %519 = vmatprep.mubr.bf16.mxu0 0
    %520 = vmatmul.mubr.bf16.gmra.mrb[0].mxu0 %v406
    %v521 = vpop.f32.mrb[0].mxu0
    %v522 = vadd.f32 %v363, %v521
    %v523 = vpop.f32.mrb[0].mxu0
    %v524 = vpop.f32.mrb[0].mxu0
    %v525 = vadd.f32 %v363, %v524
    %v526 = vpop.f32.mrb[0].mxu0
    %527 = vmatprep.mubr.bf16.mxu0 0
    %528 = vmatmul.mubr.bf16.gmra.mrb[0].mxu0 %v409
    %v529 = vpop.f32.mrb[0].mxu0
    %v530 = vadd.f32 %v363, %v529
    %v531 = vpop.f32.mrb[0].mxu0
    %v532 = vpop.f32.mrb[0].mxu0
    %v533 = vadd.f32 %v363, %v532
    %v534 = vpop.f32.mrb[0].mxu0
    %535 = vmatprep.mubr.bf16.mxu0 0
    %536 = vmatmul.mubr.bf16.gmra.mrb[0].mxu0 %v412
    %v537 = vpop.f32.mrb[0].mxu0
    %v538 = vadd.f32 %v363, %v537
    %v539 = vpop.f32.mrb[0].mxu0
    %v540 = vpop.f32.mrb[0].mxu0
    %v541 = vadd.f32 %v363, %v540
    %v542 = vpop.f32.mrb[0].mxu0
    %543 = vmatprep.mubr.bf16.mxu0 0
    %544 = vmatmul.mubr.bf16.gmra.mrb[0].mxu0 %v415
    %v545 = vpop.f32.mrb[0].mxu0
    %v546 = vadd.f32 %v363, %v545
    %v547 = vpop.f32.mrb[0].mxu0
    %v548 = vpop.f32.mrb[0].mxu0
    %v549 = vadd.f32 %v363, %v548
    %v550 = vpop.f32.mrb[0].mxu0
    %551 = vmatprep.mubr.bf16.mxu0 0
    %552 = vmatmul.mubr.bf16.gmra.mrb[0].mxu0 %v418
    %v553 = vpop.f32.mrb[0].mxu0
    %v554 = vadd.f32 %v363, %v553
    %v555 = vpop.f32.mrb[0].mxu0
    %v556 = vpop.f32.mrb[0].mxu0
    %v557 = vadd.f32 %v363, %v556
    %v558 = vpop.f32.mrb[0].mxu0
    %559 = vmatprep.mubr.bf16.mxu0 0
    %560 = vmatmul.mubr.bf16.gmra.mrb[0].mxu0 %v421
    %v561 = vpop.f32.mrb[0].mxu0
    %v562 = vadd.f32 %v363, %v561
    %v563 = vpop.f32.mrb[0].mxu0
    %v564 = vpop.f32.mrb[0].mxu0
    %v565 = vadd.f32 %v363, %v564
    %v566 = vpop.f32.mrb[0].mxu0
    %567 = vmatprep.mubr.bf16.mxu0 0
    %568 = vmatmul.mubr.bf16.gmra.mrb[0].mxu0 %v424
    %v569 = vpop.f32.mrb[0].mxu0
    %v570 = vadd.f32 %v363, %v569
    %v571 = vpop.f32.mrb[0].mxu0
    %v572 = vpop.f32.mrb[0].mxu0
    %v573 = vadd.f32 %v363, %v572
    %v574 = vpop.f32.mrb[0].mxu0
    %575 = vmatprep.mubr.bf16.mxu0 0
    %576 = vmatmul.mubr.bf16.gmra.mrb[0].mxu0 %v427
    %v577 = vpop.f32.mrb[0].mxu0
    %v578 = vadd.f32 %v363, %v577
    %v579 = vpop.f32.mrb[0].mxu0
    %v580 = vpop.f32.mrb[0].mxu0
    %v581 = vadd.f32 %v363, %v580
    %v582 = vpop.f32.mrb[0].mxu0
    %583 = vmatprep.mubr.bf16.mxu0 0
    %584 = vmatmul.mubr.bf16.gmra.mrb[0].mxu0 %v430
    %v585 = vpop.f32.mrb[0].mxu0
    %v586 = vadd.f32 %v363, %v585
    %v587 = vpop.f32.mrb[0].mxu0
    %v588 = vpop.f32.mrb[0].mxu0
    %v589 = vadd.f32 %v363, %v588
    %v590 = vpop.f32.mrb[0].mxu0
    %591 = vmatprep.mubr.bf16.mxu0 0
    %592 = vmatmul.mubr.bf16.gmra.mrb[0].mxu0 %v433
    %v593 = vpop.f32.mrb[0].mxu0
    %v594 = vadd.f32 %v363, %v593
    %v595 = vpop.f32.mrb[0].mxu0
    %v596 = vpop.f32.mrb[0].mxu0
    %v597 = vadd.f32 %v363, %v596
    %v598 = vpop.f32.mrb[0].mxu0
    %599 = vdwg.mxu0
    %v600 = vmax.f32 %v474, 0.0
    %v601 = vmax.f32 %v477, 0.0
    %v602 = vmax.f32 %v482, 0.0
    %v603 = vmax.f32 %v485, 0.0
    %v604 = vmax.f32 %v490, 0.0
    %v605 = vmax.f32 %v493, 0.0
    %v606 = vmax.f32 %v498, 0.0
    %v607 = vmax.f32 %v501, 0.0
    %v608 = vmax.f32 %v506, 0.0
    %v609 = vmax.f32 %v509, 0.0
    %v610 = vmax.f32 %v514, 0.0
    %v611 = vmax.f32 %v517, 0.0
    %v612 = vmax.f32 %v522, 0.0
    %v613 = vmax.f32 %v525, 0.0
    %v614 = vmax.f32 %v530, 0.0
    %v615 = vmax.f32 %v533, 0.0
    %v616 = vmax.f32 %v538, 0.0
    %v617 = vmax.f32 %v541, 0.0
    %v618 = vmax.f32 %v546, 0.0
    %v619 = vmax.f32 %v549, 0.0
    %v620 = vmax.f32 %v554, 0.0
    %v621 = vmax.f32 %v557, 0.0
    %v622 = vmax.f32 %v562, 0.0
    %v623 = vmax.f32 %v565, 0.0
    %v624 = vmax.f32 %v570, 0.0
    %v625 = vmax.f32 %v573, 0.0
    %v626 = vmax.f32 %v578, 0.0
    %v627 = vmax.f32 %v581, 0.0
    %v628 = vmax.f32 %v586, 0.0
    %v629 = vmax.f32 %v589, 0.0
    %v630 = vmax.f32 %v594, 0.0
    %v631 = vmax.f32 %v597, 0.0
    %v632 = vld [vmem:[%s5] sm:$0x1]
    %v634 = vlaneseq
    %v635 = vshrl.u32 %v634, 7
    %v636 = vsub.s32 0, %v635
    %v637 = vrot.slane %v632, %v636
    %v639 = vmul.f32 %v600, %v637
    %v640 = vmul.f32 %v601, %v637
    %v641 = vmul.f32 %v602, %v637
    %v642 = vmul.f32 %v603, %v637
    %v643 = vmul.f32 %v604, %v637
    %v644 = vmul.f32 %v605, %v637
    %v645 = vmul.f32 %v606, %v637
    %v646 = vmul.f32 %v607, %v637
    %v647 = vmul.f32 %v608, %v637
    %v648 = vmul.f32 %v609, %v637
    %v649 = vmul.f32 %v610, %v637
    %v650 = vmul.f32 %v611, %v637
    %v651 = vmul.f32 %v612, %v637
    %v652 = vmul.f32 %v613, %v637
    %v653 = vmul.f32 %v614, %v637
    %v654 = vmul.f32 %v615, %v637
    %v655 = vmul.f32 %v616, %v637
    %v656 = vmul.f32 %v617, %v637
    %v657 = vmul.f32 %v618, %v637
    %v658 = vmul.f32 %v619, %v637
    %v659 = vmul.f32 %v620, %v637
    %v660 = vmul.f32 %v621, %v637
    %v661 = vmul.f32 %v622, %v637
    %v662 = vmul.f32 %v623, %v637
    %v663 = vmul.f32 %v624, %v637
    %v664 = vmul.f32 %v625, %v637
    %v665 = vmul.f32 %v626, %v637
    %v666 = vmul.f32 %v627, %v637
    %v667 = vmul.f32 %v628, %v637
    %v668 = vmul.f32 %v629, %v637
    %v669 = vmul.f32 %v630, %v637
    %v670 = vmul.f32 %v631, %v637
    %v671 = vsel %vm386, %v639, 0.0
    %672 = vadd.xlane.f32.xlu0 %v671
    %v673 = vpop.xlane.xlu0 %672
    %v674 = vsel %vm386, %v640, 0.0
    %675 = vadd.xlane.f32.xlu0 %v674
    %v676 = vpop.xlane.xlu0 %675
    %v677 = vsel %vm386, %v641, 0.0
    %678 = vadd.xlane.f32.xlu0 %v677
    %v679 = vpop.xlane.xlu0 %678
    %v680 = vsel %vm386, %v642, 0.0
    %681 = vadd.xlane.f32.xlu0 %v680
    %v682 = vpop.xlane.xlu0 %681
    %v683 = vsel %vm386, %v643, 0.0
    %684 = vadd.xlane.f32.xlu0 %v683
    %v685 = vpop.xlane.xlu0 %684
    %v686 = vsel %vm386, %v644, 0.0
    %687 = vadd.xlane.f32.xlu0 %v686
    %v688 = vpop.xlane.xlu0 %687
    %v689 = vsel %vm386, %v645, 0.0
    %690 = vadd.xlane.f32.xlu0 %v689
    %v691 = vpop.xlane.xlu0 %690
    %v692 = vsel %vm386, %v646, 0.0
    %693 = vadd.xlane.f32.xlu0 %v692
    %v694 = vpop.xlane.xlu0 %693
    %v695 = vsel %vm386, %v647, 0.0
    %696 = vadd.xlane.f32.xlu0 %v695
    %v697 = vpop.xlane.xlu0 %696
    %v698 = vsel %vm386, %v648, 0.0
    %699 = vadd.xlane.f32.xlu0 %v698
    %v700 = vpop.xlane.xlu0 %699
    %v701 = vsel %vm386, %v649, 0.0
    %702 = vadd.xlane.f32.xlu0 %v701
    %v703 = vpop.xlane.xlu0 %702
    %v704 = vsel %vm386, %v650, 0.0
    %705 = vadd.xlane.f32.xlu0 %v704
    %v706 = vpop.xlane.xlu0 %705
    %v707 = vsel %vm386, %v651, 0.0
    %708 = vadd.xlane.f32.xlu0 %v707
    %v709 = vpop.xlane.xlu0 %708
    %v710 = vsel %vm386, %v652, 0.0
    %711 = vadd.xlane.f32.xlu0 %v710
    %v712 = vpop.xlane.xlu0 %711
    %v713 = vsel %vm386, %v653, 0.0
    %714 = vadd.xlane.f32.xlu0 %v713
    %v715 = vpop.xlane.xlu0 %714
    %v716 = vsel %vm386, %v654, 0.0
    %717 = vadd.xlane.f32.xlu0 %v716
    %v718 = vpop.xlane.xlu0 %717
    %v719 = vsel %vm386, %v655, 0.0
    %720 = vadd.xlane.f32.xlu0 %v719
    %v721 = vpop.xlane.xlu0 %720
    %v722 = vsel %vm386, %v656, 0.0
    %723 = vadd.xlane.f32.xlu0 %v722
    %v724 = vpop.xlane.xlu0 %723
    %v725 = vsel %vm386, %v657, 0.0
    %726 = vadd.xlane.f32.xlu0 %v725
    %v727 = vpop.xlane.xlu0 %726
    %v728 = vsel %vm386, %v658, 0.0
    %729 = vadd.xlane.f32.xlu0 %v728
    %v730 = vpop.xlane.xlu0 %729
    %v731 = vsel %vm386, %v659, 0.0
    %732 = vadd.xlane.f32.xlu0 %v731
    %v733 = vpop.xlane.xlu0 %732
    %v734 = vsel %vm386, %v660, 0.0
    %735 = vadd.xlane.f32.xlu0 %v734
    %v736 = vpop.xlane.xlu0 %735
    %v737 = vsel %vm386, %v661, 0.0
    %738 = vadd.xlane.f32.xlu0 %v737
    %v739 = vpop.xlane.xlu0 %738
    %v740 = vsel %vm386, %v662, 0.0
    %741 = vadd.xlane.f32.xlu0 %v740
    %v742 = vpop.xlane.xlu0 %741
    %v743 = vsel %vm386, %v663, 0.0
    %744 = vadd.xlane.f32.xlu0 %v743
    %v745 = vpop.xlane.xlu0 %744
    %v746 = vsel %vm386, %v664, 0.0
    %747 = vadd.xlane.f32.xlu0 %v746
    %v748 = vpop.xlane.xlu0 %747
    %v749 = vsel %vm386, %v665, 0.0
    %750 = vadd.xlane.f32.xlu0 %v749
    %v751 = vpop.xlane.xlu0 %750
    %v752 = vsel %vm386, %v666, 0.0
    %753 = vadd.xlane.f32.xlu0 %v752
    %v754 = vpop.xlane.xlu0 %753
    %v755 = vsel %vm386, %v667, 0.0
    %756 = vadd.xlane.f32.xlu0 %v755
    %v757 = vpop.xlane.xlu0 %756
    %v758 = vsel %vm386, %v668, 0.0
    %759 = vadd.xlane.f32.xlu0 %v758
    %v760 = vpop.xlane.xlu0 %759
    %v761 = vsel %vm386, %v669, 0.0
    %762 = vadd.xlane.f32.xlu0 %v761
    %v763 = vpop.xlane.xlu0 %762
    %v764 = vsel %vm386, %v670, 0.0
    %765 = vadd.xlane.f32.xlu0 %v764
    %v766 = vpop.xlane.xlu0 %765
    %v767 = vld [vmem:[#allocation2] sm:$0x1]
    %769 = vset.pattern.permute.xlu0 0
    %770 = vperm.xlu0 %769, %v767
    %v771 = vpop.permute.xlu0 %770
    %v773 = vlaneseq
    %v774 = vshrl.u32 %v773, 7
    %v775 = vsub.s32 0, %v774
    %v776 = vrot.slane %v771, %v775
    %v777 = vadd.f32 %v673, %v776
    %v778 = vadd.f32 %v676, %v776
    %v779 = vadd.f32 %v679, %v776
    %v780 = vadd.f32 %v682, %v776
    %v781 = vadd.f32 %v685, %v776
    %v782 = vadd.f32 %v688, %v776
    %v783 = vadd.f32 %v691, %v776
    %v784 = vadd.f32 %v694, %v776
    %v785 = vadd.f32 %v697, %v776
    %v786 = vadd.f32 %v700, %v776
    %v787 = vadd.f32 %v703, %v776
    %v788 = vadd.f32 %v706, %v776
    %v789 = vadd.f32 %v709, %v776
    %v790 = vadd.f32 %v712, %v776
    %v791 = vadd.f32 %v715, %v776
    %v792 = vadd.f32 %v718, %v776
    %v793 = vadd.f32 %v721, %v776
    %v794 = vadd.f32 %v724, %v776
    %v795 = vadd.f32 %v727, %v776
    %v796 = vadd.f32 %v730, %v776
    %v797 = vadd.f32 %v733, %v776
    %v798 = vadd.f32 %v736, %v776
    %v799 = vadd.f32 %v739, %v776
    %v800 = vadd.f32 %v742, %v776
    %v801 = vadd.f32 %v745, %v776
    %v802 = vadd.f32 %v748, %v776
    %v803 = vadd.f32 %v751, %v776
    %v804 = vadd.f32 %v754, %v776
    %v805 = vadd.f32 %v757, %v776
    %v806 = vadd.f32 %v760, %v776
    %v807 = vadd.f32 %v763, %v776
    %v808 = vadd.f32 %v766, %v776
    %v841 = vlaneseq
    %v842 = vshrl.u32 %v841, 7
    %v843 = vsub.s32 0, %v842
    %v844 = vrot.slane %v777, %v843
    %v845 = vlaneseq
    %v846 = vshrl.u32 %v845, 7
    %v847 = vsub.s32 1, %v846
    %v848 = vrot.slane %v777, %v847
    %v849 = vlaneseq
    %v850 = vshrl.u32 %v849, 7
    %v851 = vsub.s32 2, %v850
    %v852 = vrot.slane %v777, %v851
    %v853 = vlaneseq
    %v854 = vshrl.u32 %v853, 7
    %v855 = vsub.s32 3, %v854
    %v856 = vrot.slane %v777, %v855
    %v857 = vlaneseq
    %v858 = vshrl.u32 %v857, 7
    %v859 = vsub.s32 4, %v858
    %v860 = vrot.slane %v777, %v859
    %v861 = vlaneseq
    %v862 = vshrl.u32 %v861, 7
    %v863 = vsub.s32 5, %v862
    %v864 = vrot.slane %v777, %v863
    %v865 = vlaneseq
    %v866 = vshrl.u32 %v865, 7
    %v867 = vsub.s32 6, %v866
    %v868 = vrot.slane %v777, %v867
    %v869 = vlaneseq
    %v870 = vshrl.u32 %v869, 7
    %v871 = vsub.s32 7, %v870
    %v872 = vrot.slane %v777, %v871
    %v873 = vlaneseq
    %v874 = vshrl.u32 %v873, 7
    %v875 = vsub.s32 0, %v874
    %v876 = vrot.slane %v778, %v875
    %v877 = vlaneseq
    %v878 = vshrl.u32 %v877, 7
    %v879 = vsub.s32 1, %v878
    %v880 = vrot.slane %v778, %v879
    %v881 = vlaneseq
    %v882 = vshrl.u32 %v881, 7
    %v883 = vsub.s32 2, %v882
    %v884 = vrot.slane %v778, %v883
    %v885 = vlaneseq
    %v886 = vshrl.u32 %v885, 7
    %v887 = vsub.s32 3, %v886
    %v888 = vrot.slane %v778, %v887
    %v889 = vlaneseq
    %v890 = vshrl.u32 %v889, 7
    %v891 = vsub.s32 4, %v890
    %v892 = vrot.slane %v778, %v891
    %v893 = vlaneseq
    %v894 = vshrl.u32 %v893, 7
    %v895 = vsub.s32 5, %v894
    %v896 = vrot.slane %v778, %v895
    %v897 = vlaneseq
    %v898 = vshrl.u32 %v897, 7
    %v899 = vsub.s32 6, %v898
    %v900 = vrot.slane %v778, %v899
    %v901 = vlaneseq
    %v902 = vshrl.u32 %v901, 7
    %v903 = vsub.s32 7, %v902
    %v904 = vrot.slane %v778, %v903
    %v905 = vlaneseq
    %v906 = vshrl.u32 %v905, 7
    %v907 = vsub.s32 0, %v906
    %v908 = vrot.slane %v779, %v907
    %v909 = vlaneseq
    %v910 = vshrl.u32 %v909, 7
    %v911 = vsub.s32 1, %v910
    %v912 = vrot.slane %v779, %v911
    %v913 = vlaneseq
    %v914 = vshrl.u32 %v913, 7
    %v915 = vsub.s32 2, %v914
    %v916 = vrot.slane %v779, %v915
    %v917 = vlaneseq
    %v918 = vshrl.u32 %v917, 7
    %v919 = vsub.s32 3, %v918
    %v920 = vrot.slane %v779, %v919
    %v921 = vlaneseq
    %v922 = vshrl.u32 %v921, 7
    %v923 = vsub.s32 4, %v922
    %v924 = vrot.slane %v779, %v923
    %v925 = vlaneseq
    %v926 = vshrl.u32 %v925, 7
    %v927 = vsub.s32 5, %v926
    %v928 = vrot.slane %v779, %v927
    %v929 = vlaneseq
    %v930 = vshrl.u32 %v929, 7
    %v931 = vsub.s32 6, %v930
    %v932 = vrot.slane %v779, %v931
    %v933 = vlaneseq
    %v934 = vshrl.u32 %v933, 7
    %v935 = vsub.s32 7, %v934
    %v936 = vrot.slane %v779, %v935
    %v937 = vlaneseq
    %v938 = vshrl.u32 %v937, 7
    %v939 = vsub.s32 0, %v938
    %v940 = vrot.slane %v780, %v939
    %v941 = vlaneseq
    %v942 = vshrl.u32 %v941, 7
    %v943 = vsub.s32 1, %v942
    %v944 = vrot.slane %v780, %v943
    %v945 = vlaneseq
    %v946 = vshrl.u32 %v945, 7
    %v947 = vsub.s32 2, %v946
    %v948 = vrot.slane %v780, %v947
    %v949 = vlaneseq
    %v950 = vshrl.u32 %v949, 7
    %v951 = vsub.s32 3, %v950
    %v952 = vrot.slane %v780, %v951
    %v953 = vlaneseq
    %v954 = vshrl.u32 %v953, 7
    %v955 = vsub.s32 4, %v954
    %v956 = vrot.slane %v780, %v955
    %v957 = vlaneseq
    %v958 = vshrl.u32 %v957, 7
    %v959 = vsub.s32 5, %v958
    %v960 = vrot.slane %v780, %v959
    %v961 = vlaneseq
    %v962 = vshrl.u32 %v961, 7
    %v963 = vsub.s32 6, %v962
    %v964 = vrot.slane %v780, %v963
    %v965 = vlaneseq
    %v966 = vshrl.u32 %v965, 7
    %v967 = vsub.s32 7, %v966
    %v968 = vrot.slane %v780, %v967
    %v969 = vlaneseq
    %v970 = vshrl.u32 %v969, 7
    %v971 = vsub.s32 0, %v970
    %v972 = vrot.slane %v781, %v971
    %v973 = vlaneseq
    %v974 = vshrl.u32 %v973, 7
    %v975 = vsub.s32 1, %v974
    %v976 = vrot.slane %v781, %v975
    %v977 = vlaneseq
    %v978 = vshrl.u32 %v977, 7
    %v979 = vsub.s32 2, %v978
    %v980 = vrot.slane %v781, %v979
    %v981 = vlaneseq
    %v982 = vshrl.u32 %v981, 7
    %v983 = vsub.s32 3, %v982
    %v984 = vrot.slane %v781, %v983
    %v985 = vlaneseq
    %v986 = vshrl.u32 %v985, 7
    %v987 = vsub.s32 4, %v986
    %v988 = vrot.slane %v781, %v987
    %v989 = vlaneseq
    %v990 = vshrl.u32 %v989, 7
    %v991 = vsub.s32 5, %v990
    %v992 = vrot.slane %v781, %v991
    %v993 = vlaneseq
    %v994 = vshrl.u32 %v993, 7
    %v995 = vsub.s32 6, %v994
    %v996 = vrot.slane %v781, %v995
    %v997 = vlaneseq
    %v998 = vshrl.u32 %v997, 7
    %v999 = vsub.s32 7, %v998
    %v1000 = vrot.slane %v781, %v999
    %v1001 = vlaneseq
    %v1002 = vshrl.u32 %v1001, 7
    %v1003 = vsub.s32 0, %v1002
    %v1004 = vrot.slane %v782, %v1003
    %v1005 = vlaneseq
    %v1006 = vshrl.u32 %v1005, 7
    %v1007 = vsub.s32 1, %v1006
    %v1008 = vrot.slane %v782, %v1007
    %v1009 = vlaneseq
    %v1010 = vshrl.u32 %v1009, 7
    %v1011 = vsub.s32 2, %v1010
    %v1012 = vrot.slane %v782, %v1011
    %v1013 = vlaneseq
    %v1014 = vshrl.u32 %v1013, 7
    %v1015 = vsub.s32 3, %v1014
    %v1016 = vrot.slane %v782, %v1015
    %v1017 = vlaneseq
    %v1018 = vshrl.u32 %v1017, 7
    %v1019 = vsub.s32 4, %v1018
    %v1020 = vrot.slane %v782, %v1019
    %v1021 = vlaneseq
    %v1022 = vshrl.u32 %v1021, 7
    %v1023 = vsub.s32 5, %v1022
    %v1024 = vrot.slane %v782, %v1023
    %v1025 = vlaneseq
    %v1026 = vshrl.u32 %v1025, 7
    %v1027 = vsub.s32 6, %v1026
    %v1028 = vrot.slane %v782, %v1027
    %v1029 = vlaneseq
    %v1030 = vshrl.u32 %v1029, 7
    %v1031 = vsub.s32 7, %v1030
    %v1032 = vrot.slane %v782, %v1031
    %v1033 = vlaneseq
    %v1034 = vshrl.u32 %v1033, 7
    %v1035 = vsub.s32 0, %v1034
    %v1036 = vrot.slane %v783, %v1035
    %v1037 = vlaneseq
    %v1038 = vshrl.u32 %v1037, 7
    %v1039 = vsub.s32 1, %v1038
    %v1040 = vrot.slane %v783, %v1039
    %v1041 = vlaneseq
    %v1042 = vshrl.u32 %v1041, 7
    %v1043 = vsub.s32 2, %v1042
    %v1044 = vrot.slane %v783, %v1043
    %v1045 = vlaneseq
    %v1046 = vshrl.u32 %v1045, 7
    %v1047 = vsub.s32 3, %v1046
    %v1048 = vrot.slane %v783, %v1047
    %v1049 = vlaneseq
    %v1050 = vshrl.u32 %v1049, 7
    %v1051 = vsub.s32 4, %v1050
    %v1052 = vrot.slane %v783, %v1051
    %v1053 = vlaneseq
    %v1054 = vshrl.u32 %v1053, 7
    %v1055 = vsub.s32 5, %v1054
    %v1056 = vrot.slane %v783, %v1055
    %v1057 = vlaneseq
    %v1058 = vshrl.u32 %v1057, 7
    %v1059 = vsub.s32 6, %v1058
    %v1060 = vrot.slane %v783, %v1059
    %v1061 = vlaneseq
    %v1062 = vshrl.u32 %v1061, 7
    %v1063 = vsub.s32 7, %v1062
    %v1064 = vrot.slane %v783, %v1063
    %v1065 = vlaneseq
    %v1066 = vshrl.u32 %v1065, 7
    %v1067 = vsub.s32 0, %v1066
    %v1068 = vrot.slane %v784, %v1067
    %v1069 = vlaneseq
    %v1070 = vshrl.u32 %v1069, 7
    %v1071 = vsub.s32 1, %v1070
    %v1072 = vrot.slane %v784, %v1071
    %v1073 = vlaneseq
    %v1074 = vshrl.u32 %v1073, 7
    %v1075 = vsub.s32 2, %v1074
    %v1076 = vrot.slane %v784, %v1075
    %v1077 = vlaneseq
    %v1078 = vshrl.u32 %v1077, 7
    %v1079 = vsub.s32 3, %v1078
    %v1080 = vrot.slane %v784, %v1079
    %v1081 = vlaneseq
    %v1082 = vshrl.u32 %v1081, 7
    %v1083 = vsub.s32 4, %v1082
    %v1084 = vrot.slane %v784, %v1083
    %v1085 = vlaneseq
    %v1086 = vshrl.u32 %v1085, 7
    %v1087 = vsub.s32 5, %v1086
    %v1088 = vrot.slane %v784, %v1087
    %v1089 = vlaneseq
    %v1090 = vshrl.u32 %v1089, 7
    %v1091 = vsub.s32 6, %v1090
    %v1092 = vrot.slane %v784, %v1091
    %v1093 = vlaneseq
    %v1094 = vshrl.u32 %v1093, 7
    %v1095 = vsub.s32 7, %v1094
    %v1096 = vrot.slane %v784, %v1095
    %v1097 = vlaneseq
    %v1098 = vshrl.u32 %v1097, 7
    %v1099 = vsub.s32 0, %v1098
    %v1100 = vrot.slane %v785, %v1099
    %v1101 = vlaneseq
    %v1102 = vshrl.u32 %v1101, 7
    %v1103 = vsub.s32 1, %v1102
    %v1104 = vrot.slane %v785, %v1103
    %v1105 = vlaneseq
    %v1106 = vshrl.u32 %v1105, 7
    %v1107 = vsub.s32 2, %v1106
    %v1108 = vrot.slane %v785, %v1107
    %v1109 = vlaneseq
    %v1110 = vshrl.u32 %v1109, 7
    %v1111 = vsub.s32 3, %v1110
    %v1112 = vrot.slane %v785, %v1111
    %v1113 = vlaneseq
    %v1114 = vshrl.u32 %v1113, 7
    %v1115 = vsub.s32 4, %v1114
    %v1116 = vrot.slane %v785, %v1115
    %v1117 = vlaneseq
    %v1118 = vshrl.u32 %v1117, 7
    %v1119 = vsub.s32 5, %v1118
    %v1120 = vrot.slane %v785, %v1119
    %v1121 = vlaneseq
    %v1122 = vshrl.u32 %v1121, 7
    %v1123 = vsub.s32 6, %v1122
    %v1124 = vrot.slane %v785, %v1123
    %v1125 = vlaneseq
    %v1126 = vshrl.u32 %v1125, 7
    %v1127 = vsub.s32 7, %v1126
    %v1128 = vrot.slane %v785, %v1127
    %v1129 = vlaneseq
    %v1130 = vshrl.u32 %v1129, 7
    %v1131 = vsub.s32 0, %v1130
    %v1132 = vrot.slane %v786, %v1131
    %v1133 = vlaneseq
    %v1134 = vshrl.u32 %v1133, 7
    %v1135 = vsub.s32 1, %v1134
    %v1136 = vrot.slane %v786, %v1135
    %v1137 = vlaneseq
    %v1138 = vshrl.u32 %v1137, 7
    %v1139 = vsub.s32 2, %v1138
    %v1140 = vrot.slane %v786, %v1139
    %v1141 = vlaneseq
    %v1142 = vshrl.u32 %v1141, 7
    %v1143 = vsub.s32 3, %v1142
    %v1144 = vrot.slane %v786, %v1143
    %v1145 = vlaneseq
    %v1146 = vshrl.u32 %v1145, 7
    %v1147 = vsub.s32 4, %v1146
    %v1148 = vrot.slane %v786, %v1147
    %v1149 = vlaneseq
    %v1150 = vshrl.u32 %v1149, 7
    %v1151 = vsub.s32 5, %v1150
    %v1152 = vrot.slane %v786, %v1151
    %v1153 = vlaneseq
    %v1154 = vshrl.u32 %v1153, 7
    %v1155 = vsub.s32 6, %v1154
    %v1156 = vrot.slane %v786, %v1155
    %v1157 = vlaneseq
    %v1158 = vshrl.u32 %v1157, 7
    %v1159 = vsub.s32 7, %v1158
    %v1160 = vrot.slane %v786, %v1159
    %v1161 = vlaneseq
    %v1162 = vshrl.u32 %v1161, 7
    %v1163 = vsub.s32 0, %v1162
    %v1164 = vrot.slane %v787, %v1163
    %v1165 = vlaneseq
    %v1166 = vshrl.u32 %v1165, 7
    %v1167 = vsub.s32 1, %v1166
    %v1168 = vrot.slane %v787, %v1167
    %v1169 = vlaneseq
    %v1170 = vshrl.u32 %v1169, 7
    %v1171 = vsub.s32 2, %v1170
    %v1172 = vrot.slane %v787, %v1171
    %v1173 = vlaneseq
    %v1174 = vshrl.u32 %v1173, 7
    %v1175 = vsub.s32 3, %v1174
    %v1176 = vrot.slane %v787, %v1175
    %v1177 = vlaneseq
    %v1178 = vshrl.u32 %v1177, 7
    %v1179 = vsub.s32 4, %v1178
    %v1180 = vrot.slane %v787, %v1179
    %v1181 = vlaneseq
    %v1182 = vshrl.u32 %v1181, 7
    %v1183 = vsub.s32 5, %v1182
    %v1184 = vrot.slane %v787, %v1183
    %v1185 = vlaneseq
    %v1186 = vshrl.u32 %v1185, 7
    %v1187 = vsub.s32 6, %v1186
    %v1188 = vrot.slane %v787, %v1187
    %v1189 = vlaneseq
    %v1190 = vshrl.u32 %v1189, 7
    %v1191 = vsub.s32 7, %v1190
    %v1192 = vrot.slane %v787, %v1191
    %v1193 = vlaneseq
    %v1194 = vshrl.u32 %v1193, 7
    %v1195 = vsub.s32 0, %v1194
    %v1196 = vrot.slane %v788, %v1195
    %v1197 = vlaneseq
    %v1198 = vshrl.u32 %v1197, 7
    %v1199 = vsub.s32 1, %v1198
    %v1200 = vrot.slane %v788, %v1199
    %v1201 = vlaneseq
    %v1202 = vshrl.u32 %v1201, 7
    %v1203 = vsub.s32 2, %v1202
    %v1204 = vrot.slane %v788, %v1203
    %v1205 = vlaneseq
    %v1206 = vshrl.u32 %v1205, 7
    %v1207 = vsub.s32 3, %v1206
    %v1208 = vrot.slane %v788, %v1207
    %v1209 = vlaneseq
    %v1210 = vshrl.u32 %v1209, 7
    %v1211 = vsub.s32 4, %v1210
    %v1212 = vrot.slane %v788, %v1211
    %v1213 = vlaneseq
    %v1214 = vshrl.u32 %v1213, 7
    %v1215 = vsub.s32 5, %v1214
    %v1216 = vrot.slane %v788, %v1215
    %v1217 = vlaneseq
    %v1218 = vshrl.u32 %v1217, 7
    %v1219 = vsub.s32 6, %v1218
    %v1220 = vrot.slane %v788, %v1219
    %v1221 = vlaneseq
    %v1222 = vshrl.u32 %v1221, 7
    %v1223 = vsub.s32 7, %v1222
    %v1224 = vrot.slane %v788, %v1223
    %v1225 = vlaneseq
    %v1226 = vshrl.u32 %v1225, 7
    %v1227 = vsub.s32 0, %v1226
    %v1228 = vrot.slane %v789, %v1227
    %v1229 = vlaneseq
    %v1230 = vshrl.u32 %v1229, 7
    %v1231 = vsub.s32 1, %v1230
    %v1232 = vrot.slane %v789, %v1231
    %v1233 = vlaneseq
    %v1234 = vshrl.u32 %v1233, 7
    %v1235 = vsub.s32 2, %v1234
    %v1236 = vrot.slane %v789, %v1235
    %v1237 = vlaneseq
    %v1238 = vshrl.u32 %v1237, 7
    %v1239 = vsub.s32 3, %v1238
    %v1240 = vrot.slane %v789, %v1239
    %v1241 = vlaneseq
    %v1242 = vshrl.u32 %v1241, 7
    %v1243 = vsub.s32 4, %v1242
    %v1244 = vrot.slane %v789, %v1243
    %v1245 = vlaneseq
    %v1246 = vshrl.u32 %v1245, 7
    %v1247 = vsub.s32 5, %v1246
    %v1248 = vrot.slane %v789, %v1247
    %v1249 = vlaneseq
    %v1250 = vshrl.u32 %v1249, 7
    %v1251 = vsub.s32 6, %v1250
    %v1252 = vrot.slane %v789, %v1251
    %v1253 = vlaneseq
    %v1254 = vshrl.u32 %v1253, 7
    %v1255 = vsub.s32 7, %v1254
    %v1256 = vrot.slane %v789, %v1255
    %v1257 = vlaneseq
    %v1258 = vshrl.u32 %v1257, 7
    %v1259 = vsub.s32 0, %v1258
    %v1260 = vrot.slane %v790, %v1259
    %v1261 = vlaneseq
    %v1262 = vshrl.u32 %v1261, 7
    %v1263 = vsub.s32 1, %v1262
    %v1264 = vrot.slane %v790, %v1263
    %v1265 = vlaneseq
    %v1266 = vshrl.u32 %v1265, 7
    %v1267 = vsub.s32 2, %v1266
    %v1268 = vrot.slane %v790, %v1267
    %v1269 = vlaneseq
    %v1270 = vshrl.u32 %v1269, 7
    %v1271 = vsub.s32 3, %v1270
    %v1272 = vrot.slane %v790, %v1271
    %v1273 = vlaneseq
    %v1274 = vshrl.u32 %v1273, 7
    %v1275 = vsub.s32 4, %v1274
    %v1276 = vrot.slane %v790, %v1275
    %v1277 = vlaneseq
    %v1278 = vshrl.u32 %v1277, 7
    %v1279 = vsub.s32 5, %v1278
    %v1280 = vrot.slane %v790, %v1279
    %v1281 = vlaneseq
    %v1282 = vshrl.u32 %v1281, 7
    %v1283 = vsub.s32 6, %v1282
    %v1284 = vrot.slane %v790, %v1283
    %v1285 = vlaneseq
    %v1286 = vshrl.u32 %v1285, 7
    %v1287 = vsub.s32 7, %v1286
    %v1288 = vrot.slane %v790, %v1287
    %v1289 = vlaneseq
    %v1290 = vshrl.u32 %v1289, 7
    %v1291 = vsub.s32 0, %v1290
    %v1292 = vrot.slane %v791, %v1291
    %v1293 = vlaneseq
    %v1294 = vshrl.u32 %v1293, 7
    %v1295 = vsub.s32 1, %v1294
    %v1296 = vrot.slane %v791, %v1295
    %v1297 = vlaneseq
    %v1298 = vshrl.u32 %v1297, 7
    %v1299 = vsub.s32 2, %v1298
    %v1300 = vrot.slane %v791, %v1299
    %v1301 = vlaneseq
    %v1302 = vshrl.u32 %v1301, 7
    %v1303 = vsub.s32 3, %v1302
    %v1304 = vrot.slane %v791, %v1303
    %v1305 = vlaneseq
    %v1306 = vshrl.u32 %v1305, 7
    %v1307 = vsub.s32 4, %v1306
    %v1308 = vrot.slane %v791, %v1307
    %v1309 = vlaneseq
    %v1310 = vshrl.u32 %v1309, 7
    %v1311 = vsub.s32 5, %v1310
    %v1312 = vrot.slane %v791, %v1311
    %v1313 = vlaneseq
    %v1314 = vshrl.u32 %v1313, 7
    %v1315 = vsub.s32 6, %v1314
    %v1316 = vrot.slane %v791, %v1315
    %v1317 = vlaneseq
    %v1318 = vshrl.u32 %v1317, 7
    %v1319 = vsub.s32 7, %v1318
    %v1320 = vrot.slane %v791, %v1319
    %v1321 = vlaneseq
    %v1322 = vshrl.u32 %v1321, 7
    %v1323 = vsub.s32 0, %v1322
    %v1324 = vrot.slane %v792, %v1323
    %v1325 = vlaneseq
    %v1326 = vshrl.u32 %v1325, 7
    %v1327 = vsub.s32 1, %v1326
    %v1328 = vrot.slane %v792, %v1327
    %v1329 = vlaneseq
    %v1330 = vshrl.u32 %v1329, 7
    %v1331 = vsub.s32 2, %v1330
    %v1332 = vrot.slane %v792, %v1331
    %v1333 = vlaneseq
    %v1334 = vshrl.u32 %v1333, 7
    %v1335 = vsub.s32 3, %v1334
    %v1336 = vrot.slane %v792, %v1335
    %v1337 = vlaneseq
    %v1338 = vshrl.u32 %v1337, 7
    %v1339 = vsub.s32 4, %v1338
    %v1340 = vrot.slane %v792, %v1339
    %v1341 = vlaneseq
    %v1342 = vshrl.u32 %v1341, 7
    %v1343 = vsub.s32 5, %v1342
    %v1344 = vrot.slane %v792, %v1343
    %v1345 = vlaneseq
    %v1346 = vshrl.u32 %v1345, 7
    %v1347 = vsub.s32 6, %v1346
    %v1348 = vrot.slane %v792, %v1347
    %v1349 = vlaneseq
    %v1350 = vshrl.u32 %v1349, 7
    %v1351 = vsub.s32 7, %v1350
    %v1352 = vrot.slane %v792, %v1351
    %v1353 = vlaneseq
    %v1354 = vshrl.u32 %v1353, 7
    %v1355 = vsub.s32 0, %v1354
    %v1356 = vrot.slane %v793, %v1355
    %v1357 = vlaneseq
    %v1358 = vshrl.u32 %v1357, 7
    %v1359 = vsub.s32 1, %v1358
    %v1360 = vrot.slane %v793, %v1359
    %v1361 = vlaneseq
    %v1362 = vshrl.u32 %v1361, 7
    %v1363 = vsub.s32 2, %v1362
    %v1364 = vrot.slane %v793, %v1363
    %v1365 = vlaneseq
    %v1366 = vshrl.u32 %v1365, 7
    %v1367 = vsub.s32 3, %v1366
    %v1368 = vrot.slane %v793, %v1367
    %v1369 = vlaneseq
    %v1370 = vshrl.u32 %v1369, 7
    %v1371 = vsub.s32 4, %v1370
    %v1372 = vrot.slane %v793, %v1371
    %v1373 = vlaneseq
    %v1374 = vshrl.u32 %v1373, 7
    %v1375 = vsub.s32 5, %v1374
    %v1376 = vrot.slane %v793, %v1375
    %v1377 = vlaneseq
    %v1378 = vshrl.u32 %v1377, 7
    %v1379 = vsub.s32 6, %v1378
    %v1380 = vrot.slane %v793, %v1379
    %v1381 = vlaneseq
    %v1382 = vshrl.u32 %v1381, 7
    %v1383 = vsub.s32 7, %v1382
    %v1384 = vrot.slane %v793, %v1383
    %v1385 = vlaneseq
    %v1386 = vshrl.u32 %v1385, 7
    %v1387 = vsub.s32 0, %v1386
    %v1388 = vrot.slane %v794, %v1387
    %v1389 = vlaneseq
    %v1390 = vshrl.u32 %v1389, 7
    %v1391 = vsub.s32 1, %v1390
    %v1392 = vrot.slane %v794, %v1391
    %v1393 = vlaneseq
    %v1394 = vshrl.u32 %v1393, 7
    %v1395 = vsub.s32 2, %v1394
    %v1396 = vrot.slane %v794, %v1395
    %v1397 = vlaneseq
    %v1398 = vshrl.u32 %v1397, 7
    %v1399 = vsub.s32 3, %v1398
    %v1400 = vrot.slane %v794, %v1399
    %v1401 = vlaneseq
    %v1402 = vshrl.u32 %v1401, 7
    %v1403 = vsub.s32 4, %v1402
    %v1404 = vrot.slane %v794, %v1403
    %v1405 = vlaneseq
    %v1406 = vshrl.u32 %v1405, 7
    %v1407 = vsub.s32 5, %v1406
    %v1408 = vrot.slane %v794, %v1407
    %v1409 = vlaneseq
    %v1410 = vshrl.u32 %v1409, 7
    %v1411 = vsub.s32 6, %v1410
    %v1412 = vrot.slane %v794, %v1411
    %v1413 = vlaneseq
    %v1414 = vshrl.u32 %v1413, 7
    %v1415 = vsub.s32 7, %v1414
    %v1416 = vrot.slane %v794, %v1415
    %v1417 = vlaneseq
    %v1418 = vshrl.u32 %v1417, 7
    %v1419 = vsub.s32 0, %v1418
    %v1420 = vrot.slane %v795, %v1419
    %v1421 = vlaneseq
    %v1422 = vshrl.u32 %v1421, 7
    %v1423 = vsub.s32 1, %v1422
    %v1424 = vrot.slane %v795, %v1423
    %v1425 = vlaneseq
    %v1426 = vshrl.u32 %v1425, 7
    %v1427 = vsub.s32 2, %v1426
    %v1428 = vrot.slane %v795, %v1427
    %v1429 = vlaneseq
    %v1430 = vshrl.u32 %v1429, 7
    %v1431 = vsub.s32 3, %v1430
    %v1432 = vrot.slane %v795, %v1431
    %v1433 = vlaneseq
    %v1434 = vshrl.u32 %v1433, 7
    %v1435 = vsub.s32 4, %v1434
    %v1436 = vrot.slane %v795, %v1435
    %v1437 = vlaneseq
    %v1438 = vshrl.u32 %v1437, 7
    %v1439 = vsub.s32 5, %v1438
    %v1440 = vrot.slane %v795, %v1439
    %v1441 = vlaneseq
    %v1442 = vshrl.u32 %v1441, 7
    %v1443 = vsub.s32 6, %v1442
    %v1444 = vrot.slane %v795, %v1443
    %v1445 = vlaneseq
    %v1446 = vshrl.u32 %v1445, 7
    %v1447 = vsub.s32 7, %v1446
    %v1448 = vrot.slane %v795, %v1447
    %v1449 = vlaneseq
    %v1450 = vshrl.u32 %v1449, 7
    %v1451 = vsub.s32 0, %v1450
    %v1452 = vrot.slane %v796, %v1451
    %v1453 = vlaneseq
    %v1454 = vshrl.u32 %v1453, 7
    %v1455 = vsub.s32 1, %v1454
    %v1456 = vrot.slane %v796, %v1455
    %v1457 = vlaneseq
    %v1458 = vshrl.u32 %v1457, 7
    %v1459 = vsub.s32 2, %v1458
    %v1460 = vrot.slane %v796, %v1459
    %v1461 = vlaneseq
    %v1462 = vshrl.u32 %v1461, 7
    %v1463 = vsub.s32 3, %v1462
    %v1464 = vrot.slane %v796, %v1463
    %v1465 = vlaneseq
    %v1466 = vshrl.u32 %v1465, 7
    %v1467 = vsub.s32 4, %v1466
    %v1468 = vrot.slane %v796, %v1467
    %v1469 = vlaneseq
    %v1470 = vshrl.u32 %v1469, 7
    %v1471 = vsub.s32 5, %v1470
    %v1472 = vrot.slane %v796, %v1471
    %v1473 = vlaneseq
    %v1474 = vshrl.u32 %v1473, 7
    %v1475 = vsub.s32 6, %v1474
    %v1476 = vrot.slane %v796, %v1475
    %v1477 = vlaneseq
    %v1478 = vshrl.u32 %v1477, 7
    %v1479 = vsub.s32 7, %v1478
    %v1480 = vrot.slane %v796, %v1479
    %v1481 = vlaneseq
    %v1482 = vshrl.u32 %v1481, 7
    %v1483 = vsub.s32 0, %v1482
    %v1484 = vrot.slane %v797, %v1483
    %v1485 = vlaneseq
    %v1486 = vshrl.u32 %v1485, 7
    %v1487 = vsub.s32 1, %v1486
    %v1488 = vrot.slane %v797, %v1487
    %v1489 = vlaneseq
    %v1490 = vshrl.u32 %v1489, 7
    %v1491 = vsub.s32 2, %v1490
    %v1492 = vrot.slane %v797, %v1491
    %v1493 = vlaneseq
    %v1494 = vshrl.u32 %v1493, 7
    %v1495 = vsub.s32 3, %v1494
    %v1496 = vrot.slane %v797, %v1495
    %v1497 = vlaneseq
    %v1498 = vshrl.u32 %v1497, 7
    %v1499 = vsub.s32 4, %v1498
    %v1500 = vrot.slane %v797, %v1499
    %v1501 = vlaneseq
    %v1502 = vshrl.u32 %v1501, 7
    %v1503 = vsub.s32 5, %v1502
    %v1504 = vrot.slane %v797, %v1503
    %v1505 = vlaneseq
    %v1506 = vshrl.u32 %v1505, 7
    %v1507 = vsub.s32 6, %v1506
    %v1508 = vrot.slane %v797, %v1507
    %v1509 = vlaneseq
    %v1510 = vshrl.u32 %v1509, 7
    %v1511 = vsub.s32 7, %v1510
    %v1512 = vrot.slane %v797, %v1511
    %v1513 = vlaneseq
    %v1514 = vshrl.u32 %v1513, 7
    %v1515 = vsub.s32 0, %v1514
    %v1516 = vrot.slane %v798, %v1515
    %v1517 = vlaneseq
    %v1518 = vshrl.u32 %v1517, 7
    %v1519 = vsub.s32 1, %v1518
    %v1520 = vrot.slane %v798, %v1519
    %v1521 = vlaneseq
    %v1522 = vshrl.u32 %v1521, 7
    %v1523 = vsub.s32 2, %v1522
    %v1524 = vrot.slane %v798, %v1523
    %v1525 = vlaneseq
    %v1526 = vshrl.u32 %v1525, 7
    %v1527 = vsub.s32 3, %v1526
    %v1528 = vrot.slane %v798, %v1527
    %v1529 = vlaneseq
    %v1530 = vshrl.u32 %v1529, 7
    %v1531 = vsub.s32 4, %v1530
    %v1532 = vrot.slane %v798, %v1531
    %v1533 = vlaneseq
    %v1534 = vshrl.u32 %v1533, 7
    %v1535 = vsub.s32 5, %v1534
    %v1536 = vrot.slane %v798, %v1535
    %v1537 = vlaneseq
    %v1538 = vshrl.u32 %v1537, 7
    %v1539 = vsub.s32 6, %v1538
    %v1540 = vrot.slane %v798, %v1539
    %v1541 = vlaneseq
    %v1542 = vshrl.u32 %v1541, 7
    %v1543 = vsub.s32 7, %v1542
    %v1544 = vrot.slane %v798, %v1543
    %v1545 = vlaneseq
    %v1546 = vshrl.u32 %v1545, 7
    %v1547 = vsub.s32 0, %v1546
    %v1548 = vrot.slane %v799, %v1547
    %v1549 = vlaneseq
    %v1550 = vshrl.u32 %v1549, 7
    %v1551 = vsub.s32 1, %v1550
    %v1552 = vrot.slane %v799, %v1551
    %v1553 = vlaneseq
    %v1554 = vshrl.u32 %v1553, 7
    %v1555 = vsub.s32 2, %v1554
    %v1556 = vrot.slane %v799, %v1555
    %v1557 = vlaneseq
    %v1558 = vshrl.u32 %v1557, 7
    %v1559 = vsub.s32 3, %v1558
    %v1560 = vrot.slane %v799, %v1559
    %v1561 = vlaneseq
    %v1562 = vshrl.u32 %v1561, 7
    %v1563 = vsub.s32 4, %v1562
    %v1564 = vrot.slane %v799, %v1563
    %v1565 = vlaneseq
    %v1566 = vshrl.u32 %v1565, 7
    %v1567 = vsub.s32 5, %v1566
    %v1568 = vrot.slane %v799, %v1567
    %v1569 = vlaneseq
    %v1570 = vshrl.u32 %v1569, 7
    %v1571 = vsub.s32 6, %v1570
    %v1572 = vrot.slane %v799, %v1571
    %v1573 = vlaneseq
    %v1574 = vshrl.u32 %v1573, 7
    %v1575 = vsub.s32 7, %v1574
    %v1576 = vrot.slane %v799, %v1575
    %v1577 = vlaneseq
    %v1578 = vshrl.u32 %v1577, 7
    %v1579 = vsub.s32 0, %v1578
    %v1580 = vrot.slane %v800, %v1579
    %v1581 = vlaneseq
    %v1582 = vshrl.u32 %v1581, 7
    %v1583 = vsub.s32 1, %v1582
    %v1584 = vrot.slane %v800, %v1583
    %v1585 = vlaneseq
    %v1586 = vshrl.u32 %v1585, 7
    %v1587 = vsub.s32 2, %v1586
    %v1588 = vrot.slane %v800, %v1587
    %v1589 = vlaneseq
    %v1590 = vshrl.u32 %v1589, 7
    %v1591 = vsub.s32 3, %v1590
    %v1592 = vrot.slane %v800, %v1591
    %v1593 = vlaneseq
    %v1594 = vshrl.u32 %v1593, 7
    %v1595 = vsub.s32 4, %v1594
    %v1596 = vrot.slane %v800, %v1595
    %v1597 = vlaneseq
    %v1598 = vshrl.u32 %v1597, 7
    %v1599 = vsub.s32 5, %v1598
    %v1600 = vrot.slane %v800, %v1599
    %v1601 = vlaneseq
    %v1602 = vshrl.u32 %v1601, 7
    %v1603 = vsub.s32 6, %v1602
    %v1604 = vrot.slane %v800, %v1603
    %v1605 = vlaneseq
    %v1606 = vshrl.u32 %v1605, 7
    %v1607 = vsub.s32 7, %v1606
    %v1608 = vrot.slane %v800, %v1607
    %v1609 = vlaneseq
    %v1610 = vshrl.u32 %v1609, 7
    %v1611 = vsub.s32 0, %v1610
    %v1612 = vrot.slane %v801, %v1611
    %v1613 = vlaneseq
    %v1614 = vshrl.u32 %v1613, 7
    %v1615 = vsub.s32 1, %v1614
    %v1616 = vrot.slane %v801, %v1615
    %v1617 = vlaneseq
    %v1618 = vshrl.u32 %v1617, 7
    %v1619 = vsub.s32 2, %v1618
    %v1620 = vrot.slane %v801, %v1619
    %v1621 = vlaneseq
    %v1622 = vshrl.u32 %v1621, 7
    %v1623 = vsub.s32 3, %v1622
    %v1624 = vrot.slane %v801, %v1623
    %v1625 = vlaneseq
    %v1626 = vshrl.u32 %v1625, 7
    %v1627 = vsub.s32 4, %v1626
    %v1628 = vrot.slane %v801, %v1627
    %v1629 = vlaneseq
    %v1630 = vshrl.u32 %v1629, 7
    %v1631 = vsub.s32 5, %v1630
    %v1632 = vrot.slane %v801, %v1631
    %v1633 = vlaneseq
    %v1634 = vshrl.u32 %v1633, 7
    %v1635 = vsub.s32 6, %v1634
    %v1636 = vrot.slane %v801, %v1635
    %v1637 = vlaneseq
    %v1638 = vshrl.u32 %v1637, 7
    %v1639 = vsub.s32 7, %v1638
    %v1640 = vrot.slane %v801, %v1639
    %v1641 = vlaneseq
    %v1642 = vshrl.u32 %v1641, 7
    %v1643 = vsub.s32 0, %v1642
    %v1644 = vrot.slane %v802, %v1643
    %v1645 = vlaneseq
    %v1646 = vshrl.u32 %v1645, 7
    %v1647 = vsub.s32 1, %v1646
    %v1648 = vrot.slane %v802, %v1647
    %v1649 = vlaneseq
    %v1650 = vshrl.u32 %v1649, 7
    %v1651 = vsub.s32 2, %v1650
    %v1652 = vrot.slane %v802, %v1651
    %v1653 = vlaneseq
    %v1654 = vshrl.u32 %v1653, 7
    %v1655 = vsub.s32 3, %v1654
    %v1656 = vrot.slane %v802, %v1655
    %v1657 = vlaneseq
    %v1658 = vshrl.u32 %v1657, 7
    %v1659 = vsub.s32 4, %v1658
    %v1660 = vrot.slane %v802, %v1659
    %v1661 = vlaneseq
    %v1662 = vshrl.u32 %v1661, 7
    %v1663 = vsub.s32 5, %v1662
    %v1664 = vrot.slane %v802, %v1663
    %v1665 = vlaneseq
    %v1666 = vshrl.u32 %v1665, 7
    %v1667 = vsub.s32 6, %v1666
    %v1668 = vrot.slane %v802, %v1667
    %v1669 = vlaneseq
    %v1670 = vshrl.u32 %v1669, 7
    %v1671 = vsub.s32 7, %v1670
    %v1672 = vrot.slane %v802, %v1671
    %v1673 = vlaneseq
    %v1674 = vshrl.u32 %v1673, 7
    %v1675 = vsub.s32 0, %v1674
    %v1676 = vrot.slane %v803, %v1675
    %v1677 = vlaneseq
    %v1678 = vshrl.u32 %v1677, 7
    %v1679 = vsub.s32 1, %v1678
    %v1680 = vrot.slane %v803, %v1679
    %v1681 = vlaneseq
    %v1682 = vshrl.u32 %v1681, 7
    %v1683 = vsub.s32 2, %v1682
    %v1684 = vrot.slane %v803, %v1683
    %v1685 = vlaneseq
    %v1686 = vshrl.u32 %v1685, 7
    %v1687 = vsub.s32 3, %v1686
    %v1688 = vrot.slane %v803, %v1687
    %v1689 = vlaneseq
    %v1690 = vshrl.u32 %v1689, 7
    %v1691 = vsub.s32 4, %v1690
    %v1692 = vrot.slane %v803, %v1691
    %v1693 = vlaneseq
    %v1694 = vshrl.u32 %v1693, 7
    %v1695 = vsub.s32 5, %v1694
    %v1696 = vrot.slane %v803, %v1695
    %v1697 = vlaneseq
    %v1698 = vshrl.u32 %v1697, 7
    %v1699 = vsub.s32 6, %v1698
    %v1700 = vrot.slane %v803, %v1699
    %v1701 = vlaneseq
    %v1702 = vshrl.u32 %v1701, 7
    %v1703 = vsub.s32 7, %v1702
    %v1704 = vrot.slane %v803, %v1703
    %v1705 = vlaneseq
    %v1706 = vshrl.u32 %v1705, 7
    %v1707 = vsub.s32 0, %v1706
    %v1708 = vrot.slane %v804, %v1707
    %v1709 = vlaneseq
    %v1710 = vshrl.u32 %v1709, 7
    %v1711 = vsub.s32 1, %v1710
    %v1712 = vrot.slane %v804, %v1711
    %v1713 = vlaneseq
    %v1714 = vshrl.u32 %v1713, 7
    %v1715 = vsub.s32 2, %v1714
    %v1716 = vrot.slane %v804, %v1715
    %v1717 = vlaneseq
    %v1718 = vshrl.u32 %v1717, 7
    %v1719 = vsub.s32 3, %v1718
    %v1720 = vrot.slane %v804, %v1719
    %v1721 = vlaneseq
    %v1722 = vshrl.u32 %v1721, 7
    %v1723 = vsub.s32 4, %v1722
    %v1724 = vrot.slane %v804, %v1723
    %v1725 = vlaneseq
    %v1726 = vshrl.u32 %v1725, 7
    %v1727 = vsub.s32 5, %v1726
    %v1728 = vrot.slane %v804, %v1727
    %v1729 = vlaneseq
    %v1730 = vshrl.u32 %v1729, 7
    %v1731 = vsub.s32 6, %v1730
    %v1732 = vrot.slane %v804, %v1731
    %v1733 = vlaneseq
    %v1734 = vshrl.u32 %v1733, 7
    %v1735 = vsub.s32 7, %v1734
    %v1736 = vrot.slane %v804, %v1735
    %v1737 = vlaneseq
    %v1738 = vshrl.u32 %v1737, 7
    %v1739 = vsub.s32 0, %v1738
    %v1740 = vrot.slane %v805, %v1739
    %v1741 = vlaneseq
    %v1742 = vshrl.u32 %v1741, 7
    %v1743 = vsub.s32 1, %v1742
    %v1744 = vrot.slane %v805, %v1743
    %v1745 = vlaneseq
    %v1746 = vshrl.u32 %v1745, 7
    %v1747 = vsub.s32 2, %v1746
    %v1748 = vrot.slane %v805, %v1747
    %v1749 = vlaneseq
    %v1750 = vshrl.u32 %v1749, 7
    %v1751 = vsub.s32 3, %v1750
    %v1752 = vrot.slane %v805, %v1751
    %v1753 = vlaneseq
    %v1754 = vshrl.u32 %v1753, 7
    %v1755 = vsub.s32 4, %v1754
    %v1756 = vrot.slane %v805, %v1755
    %v1757 = vlaneseq
    %v1758 = vshrl.u32 %v1757, 7
    %v1759 = vsub.s32 5, %v1758
    %v1760 = vrot.slane %v805, %v1759
    %v1761 = vlaneseq
    %v1762 = vshrl.u32 %v1761, 7
    %v1763 = vsub.s32 6, %v1762
    %v1764 = vrot.slane %v805, %v1763
    %v1765 = vlaneseq
    %v1766 = vshrl.u32 %v1765, 7
    %v1767 = vsub.s32 7, %v1766
    %v1768 = vrot.slane %v805, %v1767
    %v1769 = vlaneseq
    %v1770 = vshrl.u32 %v1769, 7
    %v1771 = vsub.s32 0, %v1770
    %v1772 = vrot.slane %v806, %v1771
    %v1773 = vlaneseq
    %v1774 = vshrl.u32 %v1773, 7
    %v1775 = vsub.s32 1, %v1774
    %v1776 = vrot.slane %v806, %v1775
    %v1777 = vlaneseq
    %v1778 = vshrl.u32 %v1777, 7
    %v1779 = vsub.s32 2, %v1778
    %v1780 = vrot.slane %v806, %v1779
    %v1781 = vlaneseq
    %v1782 = vshrl.u32 %v1781, 7
    %v1783 = vsub.s32 3, %v1782
    %v1784 = vrot.slane %v806, %v1783
    %v1785 = vlaneseq
    %v1786 = vshrl.u32 %v1785, 7
    %v1787 = vsub.s32 4, %v1786
    %v1788 = vrot.slane %v806, %v1787
    %v1789 = vlaneseq
    %v1790 = vshrl.u32 %v1789, 7
    %v1791 = vsub.s32 5, %v1790
    %v1792 = vrot.slane %v806, %v1791
    %v1793 = vlaneseq
    %v1794 = vshrl.u32 %v1793, 7
    %v1795 = vsub.s32 6, %v1794
    %v1796 = vrot.slane %v806, %v1795
    %v1797 = vlaneseq
    %v1798 = vshrl.u32 %v1797, 7
    %v1799 = vsub.s32 7, %v1798
    %v1800 = vrot.slane %v806, %v1799
    %v1801 = vlaneseq
    %v1802 = vshrl.u32 %v1801, 7
    %v1803 = vsub.s32 0, %v1802
    %v1804 = vrot.slane %v807, %v1803
    %v1805 = vlaneseq
    %v1806 = vshrl.u32 %v1805, 7
    %v1807 = vsub.s32 1, %v1806
    %v1808 = vrot.slane %v807, %v1807
    %v1809 = vlaneseq
    %v1810 = vshrl.u32 %v1809, 7
    %v1811 = vsub.s32 2, %v1810
    %v1812 = vrot.slane %v807, %v1811
    %v1813 = vlaneseq
    %v1814 = vshrl.u32 %v1813, 7
    %v1815 = vsub.s32 3, %v1814
    %v1816 = vrot.slane %v807, %v1815
    %v1817 = vlaneseq
    %v1818 = vshrl.u32 %v1817, 7
    %v1819 = vsub.s32 4, %v1818
    %v1820 = vrot.slane %v807, %v1819
    %v1821 = vlaneseq
    %v1822 = vshrl.u32 %v1821, 7
    %v1823 = vsub.s32 5, %v1822
    %v1824 = vrot.slane %v807, %v1823
    %v1825 = vlaneseq
    %v1826 = vshrl.u32 %v1825, 7
    %v1827 = vsub.s32 6, %v1826
    %v1828 = vrot.slane %v807, %v1827
    %v1829 = vlaneseq
    %v1830 = vshrl.u32 %v1829, 7
    %v1831 = vsub.s32 7, %v1830
    %v1832 = vrot.slane %v807, %v1831
    %v1833 = vlaneseq
    %v1834 = vshrl.u32 %v1833, 7
    %v1835 = vsub.s32 0, %v1834
    %v1836 = vrot.slane %v808, %v1835
    %v1837 = vlaneseq
    %v1838 = vshrl.u32 %v1837, 7
    %v1839 = vsub.s32 1, %v1838
    %v1840 = vrot.slane %v808, %v1839
    %v1841 = vlaneseq
    %v1842 = vshrl.u32 %v1841, 7
    %v1843 = vsub.s32 2, %v1842
    %v1844 = vrot.slane %v808, %v1843
    %v1845 = vlaneseq
    %v1846 = vshrl.u32 %v1845, 7
    %v1847 = vsub.s32 3, %v1846
    %v1848 = vrot.slane %v808, %v1847
    %v1849 = vlaneseq
    %v1850 = vshrl.u32 %v1849, 7
    %v1851 = vsub.s32 4, %v1850
    %v1852 = vrot.slane %v808, %v1851
    %v1853 = vlaneseq
    %v1854 = vshrl.u32 %v1853, 7
    %v1855 = vsub.s32 5, %v1854
    %v1856 = vrot.slane %v808, %v1855
    %v1857 = vlaneseq
    %v1858 = vshrl.u32 %v1857, 7
    %v1859 = vsub.s32 6, %v1858
    %v1860 = vrot.slane %v808, %v1859
    %v1861 = vlaneseq
    %v1862 = vshrl.u32 %v1861, 7
    %v1863 = vsub.s32 7, %v1862
    %v1864 = vrot.slane %v808, %v1863
    %v1865 = vcombine.low %v844, %v848
    %v1866 = vcombine.low %v852, %v856
    %v1867 = vcombine.low %v860, %v864
    %v1868 = vcombine.low %v868, %v872
    %v1870 = vunpack.c.l.s4 1966171168
    %v1871 = vunpack.c.0.s8 %v1870
    %v1872 = vlaneseq
    %v1873 = vshrl.u32 %v1872, 7
    %v1874 = vsub.s32 %v1871, %v1873
    %v1875 = vrot.slane %v1865, %v1874
    %v1877 = vunpack.c.l.s4 1966171168
    %v1878 = vunpack.c.0.s8 %v1877
    %v1879 = vlaneseq
    %v1880 = vshrl.u32 %v1879, 7
    %v1881 = vsub.s32 %v1878, %v1880
    %v1882 = vrot.slane %v1866, %v1881
    %v1884 = vunpack.c.l.s4 1966171168
    %v1885 = vunpack.c.0.s8 %v1884
    %v1886 = vlaneseq
    %v1887 = vshrl.u32 %v1886, 7
    %v1888 = vsub.s32 %v1885, %v1887
    %v1889 = vrot.slane %v1867, %v1888
    %v1891 = vunpack.c.l.s4 1966171168
    %v1892 = vunpack.c.0.s8 %v1891
    %v1893 = vlaneseq
    %v1894 = vshrl.u32 %v1893, 7
    %v1895 = vsub.s32 %v1892, %v1894
    %v1896 = vrot.slane %v1868, %v1895
    %v1897 = vcombine.low %v1875, %v1882
    %v1898 = vcombine.low %v1889, %v1896
    %v1900 = vunpack.c.l.s4 1966171168
    %v1901 = vunpack.c.0.s8 %v1900
    %v1902 = vlaneseq
    %v1903 = vshrl.u32 %v1902, 7
    %v1904 = vsub.s32 %v1901, %v1903
    %v1905 = vrot.slane %v1897, %v1904
    %v1907 = vunpack.c.l.s4 1966171168
    %v1908 = vunpack.c.0.s8 %v1907
    %v1909 = vlaneseq
    %v1910 = vshrl.u32 %v1909, 7
    %v1911 = vsub.s32 %v1908, %v1910
    %v1912 = vrot.slane %v1898, %v1911
    %v1913 = vcombine.low %v1905, %v1912
    %v1914 = vcombine.low %v876, %v880
    %v1915 = vcombine.low %v884, %v888
    %v1916 = vcombine.low %v892, %v896
    %v1917 = vcombine.low %v900, %v904
    %v1919 = vunpack.c.l.s4 1966171168
    %v1920 = vunpack.c.0.s8 %v1919
    %v1921 = vlaneseq
    %v1922 = vshrl.u32 %v1921, 7
    %v1923 = vsub.s32 %v1920, %v1922
    %v1924 = vrot.slane %v1914, %v1923
    %v1926 = vunpack.c.l.s4 1966171168
    %v1927 = vunpack.c.0.s8 %v1926
    %v1928 = vlaneseq
    %v1929 = vshrl.u32 %v1928, 7
    %v1930 = vsub.s32 %v1927, %v1929
    %v1931 = vrot.slane %v1915, %v1930
    %v1933 = vunpack.c.l.s4 1966171168
    %v1934 = vunpack.c.0.s8 %v1933
    %v1935 = vlaneseq
    %v1936 = vshrl.u32 %v1935, 7
    %v1937 = vsub.s32 %v1934, %v1936
    %v1938 = vrot.slane %v1916, %v1937
    %v1940 = vunpack.c.l.s4 1966171168
    %v1941 = vunpack.c.0.s8 %v1940
    %v1942 = vlaneseq
    %v1943 = vshrl.u32 %v1942, 7
    %v1944 = vsub.s32 %v1941, %v1943
    %v1945 = vrot.slane %v1917, %v1944
    %v1946 = vcombine.low %v1924, %v1931
    %v1947 = vcombine.low %v1938, %v1945
    %v1949 = vunpack.c.l.s4 1966171168
    %v1950 = vunpack.c.0.s8 %v1949
    %v1951 = vlaneseq
    %v1952 = vshrl.u32 %v1951, 7
    %v1953 = vsub.s32 %v1950, %v1952
    %v1954 = vrot.slane %v1946, %v1953
    %v1956 = vunpack.c.l.s4 1966171168
    %v1957 = vunpack.c.0.s8 %v1956
    %v1958 = vlaneseq
    %v1959 = vshrl.u32 %v1958, 7
    %v1960 = vsub.s32 %v1957, %v1959
    %v1961 = vrot.slane %v1947, %v1960
    %v1962 = vcombine.low %v1954, %v1961
    %v1963 = vcombine.low %v908, %v912
    %v1964 = vcombine.low %v916, %v920
    %v1965 = vcombine.low %v924, %v928
    %v1966 = vcombine.low %v932, %v936
    %v1968 = vunpack.c.l.s4 1966171168
    %v1969 = vunpack.c.0.s8 %v1968
    %v1970 = vlaneseq
    %v1971 = vshrl.u32 %v1970, 7
    %v1972 = vsub.s32 %v1969, %v1971
    %v1973 = vrot.slane %v1963, %v1972
    %v1975 = vunpack.c.l.s4 1966171168
    %v1976 = vunpack.c.0.s8 %v1975
    %v1977 = vlaneseq
    %v1978 = vshrl.u32 %v1977, 7
    %v1979 = vsub.s32 %v1976, %v1978
    %v1980 = vrot.slane %v1964, %v1979
    %v1982 = vunpack.c.l.s4 1966171168
    %v1983 = vunpack.c.0.s8 %v1982
    %v1984 = vlaneseq
    %v1985 = vshrl.u32 %v1984, 7
    %v1986 = vsub.s32 %v1983, %v1985
    %v1987 = vrot.slane %v1965, %v1986
    %v1989 = vunpack.c.l.s4 1966171168
    %v1990 = vunpack.c.0.s8 %v1989
    %v1991 = vlaneseq
    %v1992 = vshrl.u32 %v1991, 7
    %v1993 = vsub.s32 %v1990, %v1992
    %v1994 = vrot.slane %v1966, %v1993
    %v1995 = vcombine.low %v1973, %v1980
    %v1996 = vcombine.low %v1987, %v1994
    %v1998 = vunpack.c.l.s4 1966171168
    %v1999 = vunpack.c.0.s8 %v1998
    %v2000 = vlaneseq
    %v2001 = vshrl.u32 %v2000, 7
    %v2002 = vsub.s32 %v1999, %v2001
    %v2003 = vrot.slane %v1995, %v2002
    %v2005 = vunpack.c.l.s4 1966171168
    %v2006 = vunpack.c.0.s8 %v2005
    %v2007 = vlaneseq
    %v2008 = vshrl.u32 %v2007, 7
    %v2009 = vsub.s32 %v2006, %v2008
    %v2010 = vrot.slane %v1996, %v2009
    %v2011 = vcombine.low %v2003, %v2010
    %v2012 = vcombine.low %v940, %v944
    %v2013 = vcombine.low %v948, %v952
    %v2014 = vcombine.low %v956, %v960
    %v2015 = vcombine.low %v964, %v968
    %v2017 = vunpack.c.l.s4 1966171168
    %v2018 = vunpack.c.0.s8 %v2017
    %v2019 = vlaneseq
    %v2020 = vshrl.u32 %v2019, 7
    %v2021 = vsub.s32 %v2018, %v2020
    %v2022 = vrot.slane %v2012, %v2021
    %v2024 = vunpack.c.l.s4 1966171168
    %v2025 = vunpack.c.0.s8 %v2024
    %v2026 = vlaneseq
    %v2027 = vshrl.u32 %v2026, 7
    %v2028 = vsub.s32 %v2025, %v2027
    %v2029 = vrot.slane %v2013, %v2028
    %v2031 = vunpack.c.l.s4 1966171168
    %v2032 = vunpack.c.0.s8 %v2031
    %v2033 = vlaneseq
    %v2034 = vshrl.u32 %v2033, 7
    %v2035 = vsub.s32 %v2032, %v2034
    %v2036 = vrot.slane %v2014, %v2035
    %v2038 = vunpack.c.l.s4 1966171168
    %v2039 = vunpack.c.0.s8 %v2038
    %v2040 = vlaneseq
    %v2041 = vshrl.u32 %v2040, 7
    %v2042 = vsub.s32 %v2039, %v2041
    %v2043 = vrot.slane %v2015, %v2042
    %v2044 = vcombine.low %v2022, %v2029
    %v2045 = vcombine.low %v2036, %v2043
    %v2047 = vunpack.c.l.s4 1966171168
    %v2048 = vunpack.c.0.s8 %v2047
    %v2049 = vlaneseq
    %v2050 = vshrl.u32 %v2049, 7
    %v2051 = vsub.s32 %v2048, %v2050
    %v2052 = vrot.slane %v2044, %v2051
    %v2054 = vunpack.c.l.s4 1966171168
    %v2055 = vunpack.c.0.s8 %v2054
    %v2056 = vlaneseq
    %v2057 = vshrl.u32 %v2056, 7
    %v2058 = vsub.s32 %v2055, %v2057
    %v2059 = vrot.slane %v2045, %v2058
    %v2060 = vcombine.low %v2052, %v2059
    %v2061 = vcombine.low %v972, %v976
    %v2062 = vcombine.low %v980, %v984
    %v2063 = vcombine.low %v988, %v992
    %v2064 = vcombine.low %v996, %v1000
    %v2066 = vunpack.c.l.s4 1966171168
    %v2067 = vunpack.c.0.s8 %v2066
    %v2068 = vlaneseq
    %v2069 = vshrl.u32 %v2068, 7
    %v2070 = vsub.s32 %v2067, %v2069
    %v2071 = vrot.slane %v2061, %v2070
    %v2073 = vunpack.c.l.s4 1966171168
    %v2074 = vunpack.c.0.s8 %v2073
    %v2075 = vlaneseq
    %v2076 = vshrl.u32 %v2075, 7
    %v2077 = vsub.s32 %v2074, %v2076
    %v2078 = vrot.slane %v2062, %v2077
    %v2080 = vunpack.c.l.s4 1966171168
    %v2081 = vunpack.c.0.s8 %v2080
    %v2082 = vlaneseq
    %v2083 = vshrl.u32 %v2082, 7
    %v2084 = vsub.s32 %v2081, %v2083
    %v2085 = vrot.slane %v2063, %v2084
    %v2087 = vunpack.c.l.s4 1966171168
    %v2088 = vunpack.c.0.s8 %v2087
    %v2089 = vlaneseq
    %v2090 = vshrl.u32 %v2089, 7
    %v2091 = vsub.s32 %v2088, %v2090
    %v2092 = vrot.slane %v2064, %v2091
    %v2093 = vcombine.low %v2071, %v2078
    %v2094 = vcombine.low %v2085, %v2092
    %v2096 = vunpack.c.l.s4 1966171168
    %v2097 = vunpack.c.0.s8 %v2096
    %v2098 = vlaneseq
    %v2099 = vshrl.u32 %v2098, 7
    %v2100 = vsub.s32 %v2097, %v2099
    %v2101 = vrot.slane %v2093, %v2100
    %v2103 = vunpack.c.l.s4 1966171168
    %v2104 = vunpack.c.0.s8 %v2103
    %v2105 = vlaneseq
    %v2106 = vshrl.u32 %v2105, 7
    %v2107 = vsub.s32 %v2104, %v2106
    %v2108 = vrot.slane %v2094, %v2107
    %v2109 = vcombine.low %v2101, %v2108
    %v2110 = vcombine.low %v1004, %v1008
    %v2111 = vcombine.low %v1012, %v1016
    %v2112 = vcombine.low %v1020, %v1024
    %v2113 = vcombine.low %v1028, %v1032
    %v2115 = vunpack.c.l.s4 1966171168
    %v2116 = vunpack.c.0.s8 %v2115
    %v2117 = vlaneseq
    %v2118 = vshrl.u32 %v2117, 7
    %v2119 = vsub.s32 %v2116, %v2118
    %v2120 = vrot.slane %v2110, %v2119
    %v2122 = vunpack.c.l.s4 1966171168
    %v2123 = vunpack.c.0.s8 %v2122
    %v2124 = vlaneseq
    %v2125 = vshrl.u32 %v2124, 7
    %v2126 = vsub.s32 %v2123, %v2125
    %v2127 = vrot.slane %v2111, %v2126
    %v2129 = vunpack.c.l.s4 1966171168
    %v2130 = vunpack.c.0.s8 %v2129
    %v2131 = vlaneseq
    %v2132 = vshrl.u32 %v2131, 7
    %v2133 = vsub.s32 %v2130, %v2132
    %v2134 = vrot.slane %v2112, %v2133
    %v2136 = vunpack.c.l.s4 1966171168
    %v2137 = vunpack.c.0.s8 %v2136
    %v2138 = vlaneseq
    %v2139 = vshrl.u32 %v2138, 7
    %v2140 = vsub.s32 %v2137, %v2139
    %v2141 = vrot.slane %v2113, %v2140
    %v2142 = vcombine.low %v2120, %v2127
    %v2143 = vcombine.low %v2134, %v2141
    %v2145 = vunpack.c.l.s4 1966171168
    %v2146 = vunpack.c.0.s8 %v2145
    %v2147 = vlaneseq
    %v2148 = vshrl.u32 %v2147, 7
    %v2149 = vsub.s32 %v2146, %v2148
    %v2150 = vrot.slane %v2142, %v2149
    %v2152 = vunpack.c.l.s4 1966171168
    %v2153 = vunpack.c.0.s8 %v2152
    %v2154 = vlaneseq
    %v2155 = vshrl.u32 %v2154, 7
    %v2156 = vsub.s32 %v2153, %v2155
    %v2157 = vrot.slane %v2143, %v2156
    %v2158 = vcombine.low %v2150, %v2157
    %v2159 = vcombine.low %v1036, %v1040
    %v2160 = vcombine.low %v1044, %v1048
    %v2161 = vcombine.low %v1052, %v1056
    %v2162 = vcombine.low %v1060, %v1064
    %v2164 = vunpack.c.l.s4 1966171168
    %v2165 = vunpack.c.0.s8 %v2164
    %v2166 = vlaneseq
    %v2167 = vshrl.u32 %v2166, 7
    %v2168 = vsub.s32 %v2165, %v2167
    %v2169 = vrot.slane %v2159, %v2168
    %v2171 = vunpack.c.l.s4 1966171168
    %v2172 = vunpack.c.0.s8 %v2171
    %v2173 = vlaneseq
    %v2174 = vshrl.u32 %v2173, 7
    %v2175 = vsub.s32 %v2172, %v2174
    %v2176 = vrot.slane %v2160, %v2175
    %v2178 = vunpack.c.l.s4 1966171168
    %v2179 = vunpack.c.0.s8 %v2178
    %v2180 = vlaneseq
    %v2181 = vshrl.u32 %v2180, 7
    %v2182 = vsub.s32 %v2179, %v2181
    %v2183 = vrot.slane %v2161, %v2182
    %v2185 = vunpack.c.l.s4 1966171168
    %v2186 = vunpack.c.0.s8 %v2185
    %v2187 = vlaneseq
    %v2188 = vshrl.u32 %v2187, 7
    %v2189 = vsub.s32 %v2186, %v2188
    %v2190 = vrot.slane %v2162, %v2189
    %v2191 = vcombine.low %v2169, %v2176
    %v2192 = vcombine.low %v2183, %v2190
    %v2194 = vunpack.c.l.s4 1966171168
    %v2195 = vunpack.c.0.s8 %v2194
    %v2196 = vlaneseq
    %v2197 = vshrl.u32 %v2196, 7
    %v2198 = vsub.s32 %v2195, %v2197
    %v2199 = vrot.slane %v2191, %v2198
    %v2201 = vunpack.c.l.s4 1966171168
    %v2202 = vunpack.c.0.s8 %v2201
    %v2203 = vlaneseq
    %v2204 = vshrl.u32 %v2203, 7
    %v2205 = vsub.s32 %v2202, %v2204
    %v2206 = vrot.slane %v2192, %v2205
    %v2207 = vcombine.low %v2199, %v2206
    %v2208 = vcombine.low %v1068, %v1072
    %v2209 = vcombine.low %v1076, %v1080
    %v2210 = vcombine.low %v1084, %v1088
    %v2211 = vcombine.low %v1092, %v1096
    %v2213 = vunpack.c.l.s4 1966171168
    %v2214 = vunpack.c.0.s8 %v2213
    %v2215 = vlaneseq
    %v2216 = vshrl.u32 %v2215, 7
    %v2217 = vsub.s32 %v2214, %v2216
    %v2218 = vrot.slane %v2208, %v2217
    %v2220 = vunpack.c.l.s4 1966171168
    %v2221 = vunpack.c.0.s8 %v2220
    %v2222 = vlaneseq
    %v2223 = vshrl.u32 %v2222, 7
    %v2224 = vsub.s32 %v2221, %v2223
    %v2225 = vrot.slane %v2209, %v2224
    %v2227 = vunpack.c.l.s4 1966171168
    %v2228 = vunpack.c.0.s8 %v2227
    %v2229 = vlaneseq
    %v2230 = vshrl.u32 %v2229, 7
    %v2231 = vsub.s32 %v2228, %v2230
    %v2232 = vrot.slane %v2210, %v2231
    %v2234 = vunpack.c.l.s4 1966171168
    %v2235 = vunpack.c.0.s8 %v2234
    %v2236 = vlaneseq
    %v2237 = vshrl.u32 %v2236, 7
    %v2238 = vsub.s32 %v2235, %v2237
    %v2239 = vrot.slane %v2211, %v2238
    %v2240 = vcombine.low %v2218, %v2225
    %v2241 = vcombine.low %v2232, %v2239
    %v2243 = vunpack.c.l.s4 1966171168
    %v2244 = vunpack.c.0.s8 %v2243
    %v2245 = vlaneseq
    %v2246 = vshrl.u32 %v2245, 7
    %v2247 = vsub.s32 %v2244, %v2246
    %v2248 = vrot.slane %v2240, %v2247
    %v2250 = vunpack.c.l.s4 1966171168
    %v2251 = vunpack.c.0.s8 %v2250
    %v2252 = vlaneseq
    %v2253 = vshrl.u32 %v2252, 7
    %v2254 = vsub.s32 %v2251, %v2253
    %v2255 = vrot.slane %v2241, %v2254
    %v2256 = vcombine.low %v2248, %v2255
    %v2257 = vcombine.low %v1100, %v1104
    %v2258 = vcombine.low %v1108, %v1112
    %v2259 = vcombine.low %v1116, %v1120
    %v2260 = vcombine.low %v1124, %v1128
    %v2262 = vunpack.c.l.s4 1966171168
    %v2263 = vunpack.c.0.s8 %v2262
    %v2264 = vlaneseq
    %v2265 = vshrl.u32 %v2264, 7
    %v2266 = vsub.s32 %v2263, %v2265
    %v2267 = vrot.slane %v2257, %v2266
    %v2269 = vunpack.c.l.s4 1966171168
    %v2270 = vunpack.c.0.s8 %v2269
    %v2271 = vlaneseq
    %v2272 = vshrl.u32 %v2271, 7
    %v2273 = vsub.s32 %v2270, %v2272
    %v2274 = vrot.slane %v2258, %v2273
    %v2276 = vunpack.c.l.s4 1966171168
    %v2277 = vunpack.c.0.s8 %v2276
    %v2278 = vlaneseq
    %v2279 = vshrl.u32 %v2278, 7
    %v2280 = vsub.s32 %v2277, %v2279
    %v2281 = vrot.slane %v2259, %v2280
    %v2283 = vunpack.c.l.s4 1966171168
    %v2284 = vunpack.c.0.s8 %v2283
    %v2285 = vlaneseq
    %v2286 = vshrl.u32 %v2285, 7
    %v2287 = vsub.s32 %v2284, %v2286
    %v2288 = vrot.slane %v2260, %v2287
    %v2289 = vcombine.low %v2267, %v2274
    %v2290 = vcombine.low %v2281, %v2288
    %v2292 = vunpack.c.l.s4 1966171168
    %v2293 = vunpack.c.0.s8 %v2292
    %v2294 = vlaneseq
    %v2295 = vshrl.u32 %v2294, 7
    %v2296 = vsub.s32 %v2293, %v2295
    %v2297 = vrot.slane %v2289, %v2296
    %v2299 = vunpack.c.l.s4 1966171168
    %v2300 = vunpack.c.0.s8 %v2299
    %v2301 = vlaneseq
    %v2302 = vshrl.u32 %v2301, 7
    %v2303 = vsub.s32 %v2300, %v2302
    %v2304 = vrot.slane %v2290, %v2303
    %v2305 = vcombine.low %v2297, %v2304
    %v2306 = vcombine.low %v1132, %v1136
    %v2307 = vcombine.low %v1140, %v1144
    %v2308 = vcombine.low %v1148, %v1152
    %v2309 = vcombine.low %v1156, %v1160
    %v2311 = vunpack.c.l.s4 1966171168
    %v2312 = vunpack.c.0.s8 %v2311
    %v2313 = vlaneseq
    %v2314 = vshrl.u32 %v2313, 7
    %v2315 = vsub.s32 %v2312, %v2314
    %v2316 = vrot.slane %v2306, %v2315
    %v2318 = vunpack.c.l.s4 1966171168
    %v2319 = vunpack.c.0.s8 %v2318
    %v2320 = vlaneseq
    %v2321 = vshrl.u32 %v2320, 7
    %v2322 = vsub.s32 %v2319, %v2321
    %v2323 = vrot.slane %v2307, %v2322
    %v2325 = vunpack.c.l.s4 1966171168
    %v2326 = vunpack.c.0.s8 %v2325
    %v2327 = vlaneseq
    %v2328 = vshrl.u32 %v2327, 7
    %v2329 = vsub.s32 %v2326, %v2328
    %v2330 = vrot.slane %v2308, %v2329
    %v2332 = vunpack.c.l.s4 1966171168
    %v2333 = vunpack.c.0.s8 %v2332
    %v2334 = vlaneseq
    %v2335 = vshrl.u32 %v2334, 7
    %v2336 = vsub.s32 %v2333, %v2335
    %v2337 = vrot.slane %v2309, %v2336
    %v2338 = vcombine.low %v2316, %v2323
    %v2339 = vcombine.low %v2330, %v2337
    %v2341 = vunpack.c.l.s4 1966171168
    %v2342 = vunpack.c.0.s8 %v2341
    %v2343 = vlaneseq
    %v2344 = vshrl.u32 %v2343, 7
    %v2345 = vsub.s32 %v2342, %v2344
    %v2346 = vrot.slane %v2338, %v2345
    %v2348 = vunpack.c.l.s4 1966171168
    %v2349 = vunpack.c.0.s8 %v2348
    %v2350 = vlaneseq
    %v2351 = vshrl.u32 %v2350, 7
    %v2352 = vsub.s32 %v2349, %v2351
    %v2353 = vrot.slane %v2339, %v2352
    %v2354 = vcombine.low %v2346, %v2353
    %v2355 = vcombine.low %v1164, %v1168
    %v2356 = vcombine.low %v1172, %v1176
    %v2357 = vcombine.low %v1180, %v1184
    %v2358 = vcombine.low %v1188, %v1192
    %v2360 = vunpack.c.l.s4 1966171168
    %v2361 = vunpack.c.0.s8 %v2360
    %v2362 = vlaneseq
    %v2363 = vshrl.u32 %v2362, 7
    %v2364 = vsub.s32 %v2361, %v2363
    %v2365 = vrot.slane %v2355, %v2364
    %v2367 = vunpack.c.l.s4 1966171168
    %v2368 = vunpack.c.0.s8 %v2367
    %v2369 = vlaneseq
    %v2370 = vshrl.u32 %v2369, 7
    %v2371 = vsub.s32 %v2368, %v2370
    %v2372 = vrot.slane %v2356, %v2371
    %v2374 = vunpack.c.l.s4 1966171168
    %v2375 = vunpack.c.0.s8 %v2374
    %v2376 = vlaneseq
    %v2377 = vshrl.u32 %v2376, 7
    %v2378 = vsub.s32 %v2375, %v2377
    %v2379 = vrot.slane %v2357, %v2378
    %v2381 = vunpack.c.l.s4 1966171168
    %v2382 = vunpack.c.0.s8 %v2381
    %v2383 = vlaneseq
    %v2384 = vshrl.u32 %v2383, 7
    %v2385 = vsub.s32 %v2382, %v2384
    %v2386 = vrot.slane %v2358, %v2385
    %v2387 = vcombine.low %v2365, %v2372
    %v2388 = vcombine.low %v2379, %v2386
    %v2390 = vunpack.c.l.s4 1966171168
    %v2391 = vunpack.c.0.s8 %v2390
    %v2392 = vlaneseq
    %v2393 = vshrl.u32 %v2392, 7
    %v2394 = vsub.s32 %v2391, %v2393
    %v2395 = vrot.slane %v2387, %v2394
    %v2397 = vunpack.c.l.s4 1966171168
    %v2398 = vunpack.c.0.s8 %v2397
    %v2399 = vlaneseq
    %v2400 = vshrl.u32 %v2399, 7
    %v2401 = vsub.s32 %v2398, %v2400
    %v2402 = vrot.slane %v2388, %v2401
    %v2403 = vcombine.low %v2395, %v2402
    %v2404 = vcombine.low %v1196, %v1200
    %v2405 = vcombine.low %v1204, %v1208
    %v2406 = vcombine.low %v1212, %v1216
    %v2407 = vcombine.low %v1220, %v1224
    %v2409 = vunpack.c.l.s4 1966171168
    %v2410 = vunpack.c.0.s8 %v2409
    %v2411 = vlaneseq
    %v2412 = vshrl.u32 %v2411, 7
    %v2413 = vsub.s32 %v2410, %v2412
    %v2414 = vrot.slane %v2404, %v2413
    %v2416 = vunpack.c.l.s4 1966171168
    %v2417 = vunpack.c.0.s8 %v2416
    %v2418 = vlaneseq
    %v2419 = vshrl.u32 %v2418, 7
    %v2420 = vsub.s32 %v2417, %v2419
    %v2421 = vrot.slane %v2405, %v2420
    %v2423 = vunpack.c.l.s4 1966171168
    %v2424 = vunpack.c.0.s8 %v2423
    %v2425 = vlaneseq
    %v2426 = vshrl.u32 %v2425, 7
    %v2427 = vsub.s32 %v2424, %v2426
    %v2428 = vrot.slane %v2406, %v2427
    %v2430 = vunpack.c.l.s4 1966171168
    %v2431 = vunpack.c.0.s8 %v2430
    %v2432 = vlaneseq
    %v2433 = vshrl.u32 %v2432, 7
    %v2434 = vsub.s32 %v2431, %v2433
    %v2435 = vrot.slane %v2407, %v2434
    %v2436 = vcombine.low %v2414, %v2421
    %v2437 = vcombine.low %v2428, %v2435
    %v2439 = vunpack.c.l.s4 1966171168
    %v2440 = vunpack.c.0.s8 %v2439
    %v2441 = vlaneseq
    %v2442 = vshrl.u32 %v2441, 7
    %v2443 = vsub.s32 %v2440, %v2442
    %v2444 = vrot.slane %v2436, %v2443
    %v2446 = vunpack.c.l.s4 1966171168
    %v2447 = vunpack.c.0.s8 %v2446
    %v2448 = vlaneseq
    %v2449 = vshrl.u32 %v2448, 7
    %v2450 = vsub.s32 %v2447, %v2449
    %v2451 = vrot.slane %v2437, %v2450
    %v2452 = vcombine.low %v2444, %v2451
    %v2453 = vcombine.low %v1228, %v1232
    %v2454 = vcombine.low %v1236, %v1240
    %v2455 = vcombine.low %v1244, %v1248
    %v2456 = vcombine.low %v1252, %v1256
    %v2458 = vunpack.c.l.s4 1966171168
    %v2459 = vunpack.c.0.s8 %v2458
    %v2460 = vlaneseq
    %v2461 = vshrl.u32 %v2460, 7
    %v2462 = vsub.s32 %v2459, %v2461
    %v2463 = vrot.slane %v2453, %v2462
    %v2465 = vunpack.c.l.s4 1966171168
    %v2466 = vunpack.c.0.s8 %v2465
    %v2467 = vlaneseq
    %v2468 = vshrl.u32 %v2467, 7
    %v2469 = vsub.s32 %v2466, %v2468
    %v2470 = vrot.slane %v2454, %v2469
    %v2472 = vunpack.c.l.s4 1966171168
    %v2473 = vunpack.c.0.s8 %v2472
    %v2474 = vlaneseq
    %v2475 = vshrl.u32 %v2474, 7
    %v2476 = vsub.s32 %v2473, %v2475
    %v2477 = vrot.slane %v2455, %v2476
    %v2479 = vunpack.c.l.s4 1966171168
    %v2480 = vunpack.c.0.s8 %v2479
    %v2481 = vlaneseq
    %v2482 = vshrl.u32 %v2481, 7
    %v2483 = vsub.s32 %v2480, %v2482
    %v2484 = vrot.slane %v2456, %v2483
    %v2485 = vcombine.low %v2463, %v2470
    %v2486 = vcombine.low %v2477, %v2484
    %v2488 = vunpack.c.l.s4 1966171168
    %v2489 = vunpack.c.0.s8 %v2488
    %v2490 = vlaneseq
    %v2491 = vshrl.u32 %v2490, 7
    %v2492 = vsub.s32 %v2489, %v2491
    %v2493 = vrot.slane %v2485, %v2492
    %v2495 = vunpack.c.l.s4 1966171168
    %v2496 = vunpack.c.0.s8 %v2495
    %v2497 = vlaneseq
    %v2498 = vshrl.u32 %v2497, 7
    %v2499 = vsub.s32 %v2496, %v2498
    %v2500 = vrot.slane %v2486, %v2499
    %v2501 = vcombine.low %v2493, %v2500
    %v2502 = vcombine.low %v1260, %v1264
    %v2503 = vcombine.low %v1268, %v1272
    %v2504 = vcombine.low %v1276, %v1280
    %v2505 = vcombine.low %v1284, %v1288
    %v2507 = vunpack.c.l.s4 1966171168
    %v2508 = vunpack.c.0.s8 %v2507
    %v2509 = vlaneseq
    %v2510 = vshrl.u32 %v2509, 7
    %v2511 = vsub.s32 %v2508, %v2510
    %v2512 = vrot.slane %v2502, %v2511
    %v2514 = vunpack.c.l.s4 1966171168
    %v2515 = vunpack.c.0.s8 %v2514
    %v2516 = vlaneseq
    %v2517 = vshrl.u32 %v2516, 7
    %v2518 = vsub.s32 %v2515, %v2517
    %v2519 = vrot.slane %v2503, %v2518
    %v2521 = vunpack.c.l.s4 1966171168
    %v2522 = vunpack.c.0.s8 %v2521
    %v2523 = vlaneseq
    %v2524 = vshrl.u32 %v2523, 7
    %v2525 = vsub.s32 %v2522, %v2524
    %v2526 = vrot.slane %v2504, %v2525
    %v2528 = vunpack.c.l.s4 1966171168
    %v2529 = vunpack.c.0.s8 %v2528
    %v2530 = vlaneseq
    %v2531 = vshrl.u32 %v2530, 7
    %v2532 = vsub.s32 %v2529, %v2531
    %v2533 = vrot.slane %v2505, %v2532
    %v2534 = vcombine.low %v2512, %v2519
    %v2535 = vcombine.low %v2526, %v2533
    %v2537 = vunpack.c.l.s4 1966171168
    %v2538 = vunpack.c.0.s8 %v2537
    %v2539 = vlaneseq
    %v2540 = vshrl.u32 %v2539, 7
    %v2541 = vsub.s32 %v2538, %v2540
    %v2542 = vrot.slane %v2534, %v2541
    %v2544 = vunpack.c.l.s4 1966171168
    %v2545 = vunpack.c.0.s8 %v2544
    %v2546 = vlaneseq
    %v2547 = vshrl.u32 %v2546, 7
    %v2548 = vsub.s32 %v2545, %v2547
    %v2549 = vrot.slane %v2535, %v2548
    %v2550 = vcombine.low %v2542, %v2549
    %v2551 = vcombine.low %v1292, %v1296
    %v2552 = vcombine.low %v1300, %v1304
    %v2553 = vcombine.low %v1308, %v1312
    %v2554 = vcombine.low %v1316, %v1320
    %v2556 = vunpack.c.l.s4 1966171168
    %v2557 = vunpack.c.0.s8 %v2556
    %v2558 = vlaneseq
    %v2559 = vshrl.u32 %v2558, 7
    %v2560 = vsub.s32 %v2557, %v2559
    %v2561 = vrot.slane %v2551, %v2560
    %v2563 = vunpack.c.l.s4 1966171168
    %v2564 = vunpack.c.0.s8 %v2563
    %v2565 = vlaneseq
    %v2566 = vshrl.u32 %v2565, 7
    %v2567 = vsub.s32 %v2564, %v2566
    %v2568 = vrot.slane %v2552, %v2567
    %v2570 = vunpack.c.l.s4 1966171168
    %v2571 = vunpack.c.0.s8 %v2570
    %v2572 = vlaneseq
    %v2573 = vshrl.u32 %v2572, 7
    %v2574 = vsub.s32 %v2571, %v2573
    %v2575 = vrot.slane %v2553, %v2574
    %v2577 = vunpack.c.l.s4 1966171168
    %v2578 = vunpack.c.0.s8 %v2577
    %v2579 = vlaneseq
    %v2580 = vshrl.u32 %v2579, 7
    %v2581 = vsub.s32 %v2578, %v2580
    %v2582 = vrot.slane %v2554, %v2581
    %v2583 = vcombine.low %v2561, %v2568
    %v2584 = vcombine.low %v2575, %v2582
    %v2586 = vunpack.c.l.s4 1966171168
    %v2587 = vunpack.c.0.s8 %v2586
    %v2588 = vlaneseq
    %v2589 = vshrl.u32 %v2588, 7
    %v2590 = vsub.s32 %v2587, %v2589
    %v2591 = vrot.slane %v2583, %v2590
    %v2593 = vunpack.c.l.s4 1966171168
    %v2594 = vunpack.c.0.s8 %v2593
    %v2595 = vlaneseq
    %v2596 = vshrl.u32 %v2595, 7
    %v2597 = vsub.s32 %v2594, %v2596
    %v2598 = vrot.slane %v2584, %v2597
    %v2599 = vcombine.low %v2591, %v2598
    %v2600 = vcombine.low %v1324, %v1328
    %v2601 = vcombine.low %v1332, %v1336
    %v2602 = vcombine.low %v1340, %v1344
    %v2603 = vcombine.low %v1348, %v1352
    %v2605 = vunpack.c.l.s4 1966171168
    %v2606 = vunpack.c.0.s8 %v2605
    %v2607 = vlaneseq
    %v2608 = vshrl.u32 %v2607, 7
    %v2609 = vsub.s32 %v2606, %v2608
    %v2610 = vrot.slane %v2600, %v2609
    %v2612 = vunpack.c.l.s4 1966171168
    %v2613 = vunpack.c.0.s8 %v2612
    %v2614 = vlaneseq
    %v2615 = vshrl.u32 %v2614, 7
    %v2616 = vsub.s32 %v2613, %v2615
    %v2617 = vrot.slane %v2601, %v2616
    %v2619 = vunpack.c.l.s4 1966171168
    %v2620 = vunpack.c.0.s8 %v2619
    %v2621 = vlaneseq
    %v2622 = vshrl.u32 %v2621, 7
    %v2623 = vsub.s32 %v2620, %v2622
    %v2624 = vrot.slane %v2602, %v2623
    %v2626 = vunpack.c.l.s4 1966171168
    %v2627 = vunpack.c.0.s8 %v2626
    %v2628 = vlaneseq
    %v2629 = vshrl.u32 %v2628, 7
    %v2630 = vsub.s32 %v2627, %v2629
    %v2631 = vrot.slane %v2603, %v2630
    %v2632 = vcombine.low %v2610, %v2617
    %v2633 = vcombine.low %v2624, %v2631
    %v2635 = vunpack.c.l.s4 1966171168
    %v2636 = vunpack.c.0.s8 %v2635
    %v2637 = vlaneseq
    %v2638 = vshrl.u32 %v2637, 7
    %v2639 = vsub.s32 %v2636, %v2638
    %v2640 = vrot.slane %v2632, %v2639
    %v2642 = vunpack.c.l.s4 1966171168
    %v2643 = vunpack.c.0.s8 %v2642
    %v2644 = vlaneseq
    %v2645 = vshrl.u32 %v2644, 7
    %v2646 = vsub.s32 %v2643, %v2645
    %v2647 = vrot.slane %v2633, %v2646
    %v2648 = vcombine.low %v2640, %v2647
    %v2649 = vcombine.low %v1356, %v1360
    %v2650 = vcombine.low %v1364, %v1368
    %v2651 = vcombine.low %v1372, %v1376
    %v2652 = vcombine.low %v1380, %v1384
    %v2654 = vunpack.c.l.s4 1966171168
    %v2655 = vunpack.c.0.s8 %v2654
    %v2656 = vlaneseq
    %v2657 = vshrl.u32 %v2656, 7
    %v2658 = vsub.s32 %v2655, %v2657
    %v2659 = vrot.slane %v2649, %v2658
    %v2661 = vunpack.c.l.s4 1966171168
    %v2662 = vunpack.c.0.s8 %v2661
    %v2663 = vlaneseq
    %v2664 = vshrl.u32 %v2663, 7
    %v2665 = vsub.s32 %v2662, %v2664
    %v2666 = vrot.slane %v2650, %v2665
    %v2668 = vunpack.c.l.s4 1966171168
    %v2669 = vunpack.c.0.s8 %v2668
    %v2670 = vlaneseq
    %v2671 = vshrl.u32 %v2670, 7
    %v2672 = vsub.s32 %v2669, %v2671
    %v2673 = vrot.slane %v2651, %v2672
    %v2675 = vunpack.c.l.s4 1966171168
    %v2676 = vunpack.c.0.s8 %v2675
    %v2677 = vlaneseq
    %v2678 = vshrl.u32 %v2677, 7
    %v2679 = vsub.s32 %v2676, %v2678
    %v2680 = vrot.slane %v2652, %v2679
    %v2681 = vcombine.low %v2659, %v2666
    %v2682 = vcombine.low %v2673, %v2680
    %v2684 = vunpack.c.l.s4 1966171168
    %v2685 = vunpack.c.0.s8 %v2684
    %v2686 = vlaneseq
    %v2687 = vshrl.u32 %v2686, 7
    %v2688 = vsub.s32 %v2685, %v2687
    %v2689 = vrot.slane %v2681, %v2688
    %v2691 = vunpack.c.l.s4 1966171168
    %v2692 = vunpack.c.0.s8 %v2691
    %v2693 = vlaneseq
    %v2694 = vshrl.u32 %v2693, 7
    %v2695 = vsub.s32 %v2692, %v2694
    %v2696 = vrot.slane %v2682, %v2695
    %v2697 = vcombine.low %v2689, %v2696
    %v2698 = vcombine.low %v1388, %v1392
    %v2699 = vcombine.low %v1396, %v1400
    %v2700 = vcombine.low %v1404, %v1408
    %v2701 = vcombine.low %v1412, %v1416
    %v2703 = vunpack.c.l.s4 1966171168
    %v2704 = vunpack.c.0.s8 %v2703
    %v2705 = vlaneseq
    %v2706 = vshrl.u32 %v2705, 7
    %v2707 = vsub.s32 %v2704, %v2706
    %v2708 = vrot.slane %v2698, %v2707
    %v2710 = vunpack.c.l.s4 1966171168
    %v2711 = vunpack.c.0.s8 %v2710
    %v2712 = vlaneseq
    %v2713 = vshrl.u32 %v2712, 7
    %v2714 = vsub.s32 %v2711, %v2713
    %v2715 = vrot.slane %v2699, %v2714
    %v2717 = vunpack.c.l.s4 1966171168
    %v2718 = vunpack.c.0.s8 %v2717
    %v2719 = vlaneseq
    %v2720 = vshrl.u32 %v2719, 7
    %v2721 = vsub.s32 %v2718, %v2720
    %v2722 = vrot.slane %v2700, %v2721
    %v2724 = vunpack.c.l.s4 1966171168
    %v2725 = vunpack.c.0.s8 %v2724
    %v2726 = vlaneseq
    %v2727 = vshrl.u32 %v2726, 7
    %v2728 = vsub.s32 %v2725, %v2727
    %v2729 = vrot.slane %v2701, %v2728
    %v2730 = vcombine.low %v2708, %v2715
    %v2731 = vcombine.low %v2722, %v2729
    %v2733 = vunpack.c.l.s4 1966171168
    %v2734 = vunpack.c.0.s8 %v2733
    %v2735 = vlaneseq
    %v2736 = vshrl.u32 %v2735, 7
    %v2737 = vsub.s32 %v2734, %v2736
    %v2738 = vrot.slane %v2730, %v2737
    %v2740 = vunpack.c.l.s4 1966171168
    %v2741 = vunpack.c.0.s8 %v2740
    %v2742 = vlaneseq
    %v2743 = vshrl.u32 %v2742, 7
    %v2744 = vsub.s32 %v2741, %v2743
    %v2745 = vrot.slane %v2731, %v2744
    %v2746 = vcombine.low %v2738, %v2745
    %v2747 = vcombine.low %v1420, %v1424
    %v2748 = vcombine.low %v1428, %v1432
    %v2749 = vcombine.low %v1436, %v1440
    %v2750 = vcombine.low %v1444, %v1448
    %v2752 = vunpack.c.l.s4 1966171168
    %v2753 = vunpack.c.0.s8 %v2752
    %v2754 = vlaneseq
    %v2755 = vshrl.u32 %v2754, 7
    %v2756 = vsub.s32 %v2753, %v2755
    %v2757 = vrot.slane %v2747, %v2756
    %v2759 = vunpack.c.l.s4 1966171168
    %v2760 = vunpack.c.0.s8 %v2759
    %v2761 = vlaneseq
    %v2762 = vshrl.u32 %v2761, 7
    %v2763 = vsub.s32 %v2760, %v2762
    %v2764 = vrot.slane %v2748, %v2763
    %v2766 = vunpack.c.l.s4 1966171168
    %v2767 = vunpack.c.0.s8 %v2766
    %v2768 = vlaneseq
    %v2769 = vshrl.u32 %v2768, 7
    %v2770 = vsub.s32 %v2767, %v2769
    %v2771 = vrot.slane %v2749, %v2770
    %v2773 = vunpack.c.l.s4 1966171168
    %v2774 = vunpack.c.0.s8 %v2773
    %v2775 = vlaneseq
    %v2776 = vshrl.u32 %v2775, 7
    %v2777 = vsub.s32 %v2774, %v2776
    %v2778 = vrot.slane %v2750, %v2777
    %v2779 = vcombine.low %v2757, %v2764
    %v2780 = vcombine.low %v2771, %v2778
    %v2782 = vunpack.c.l.s4 1966171168
    %v2783 = vunpack.c.0.s8 %v2782
    %v2784 = vlaneseq
    %v2785 = vshrl.u32 %v2784, 7
    %v2786 = vsub.s32 %v2783, %v2785
    %v2787 = vrot.slane %v2779, %v2786
    %v2789 = vunpack.c.l.s4 1966171168
    %v2790 = vunpack.c.0.s8 %v2789
    %v2791 = vlaneseq
    %v2792 = vshrl.u32 %v2791, 7
    %v2793 = vsub.s32 %v2790, %v2792
    %v2794 = vrot.slane %v2780, %v2793
    %v2795 = vcombine.low %v2787, %v2794
    %v2796 = vcombine.low %v1452, %v1456
    %v2797 = vcombine.low %v1460, %v1464
    %v2798 = vcombine.low %v1468, %v1472
    %v2799 = vcombine.low %v1476, %v1480
    %v2801 = vunpack.c.l.s4 1966171168
    %v2802 = vunpack.c.0.s8 %v2801
    %v2803 = vlaneseq
    %v2804 = vshrl.u32 %v2803, 7
    %v2805 = vsub.s32 %v2802, %v2804
    %v2806 = vrot.slane %v2796, %v2805
    %v2808 = vunpack.c.l.s4 1966171168
    %v2809 = vunpack.c.0.s8 %v2808
    %v2810 = vlaneseq
    %v2811 = vshrl.u32 %v2810, 7
    %v2812 = vsub.s32 %v2809, %v2811
    %v2813 = vrot.slane %v2797, %v2812
    %v2815 = vunpack.c.l.s4 1966171168
    %v2816 = vunpack.c.0.s8 %v2815
    %v2817 = vlaneseq
    %v2818 = vshrl.u32 %v2817, 7
    %v2819 = vsub.s32 %v2816, %v2818
    %v2820 = vrot.slane %v2798, %v2819
    %v2822 = vunpack.c.l.s4 1966171168
    %v2823 = vunpack.c.0.s8 %v2822
    %v2824 = vlaneseq
    %v2825 = vshrl.u32 %v2824, 7
    %v2826 = vsub.s32 %v2823, %v2825
    %v2827 = vrot.slane %v2799, %v2826
    %v2828 = vcombine.low %v2806, %v2813
    %v2829 = vcombine.low %v2820, %v2827
    %v2831 = vunpack.c.l.s4 1966171168
    %v2832 = vunpack.c.0.s8 %v2831
    %v2833 = vlaneseq
    %v2834 = vshrl.u32 %v2833, 7
    %v2835 = vsub.s32 %v2832, %v2834
    %v2836 = vrot.slane %v2828, %v2835
    %v2838 = vunpack.c.l.s4 1966171168
    %v2839 = vunpack.c.0.s8 %v2838
    %v2840 = vlaneseq
    %v2841 = vshrl.u32 %v2840, 7
    %v2842 = vsub.s32 %v2839, %v2841
    %v2843 = vrot.slane %v2829, %v2842
    %v2844 = vcombine.low %v2836, %v2843
    %v2845 = vcombine.low %v1484, %v1488
    %v2846 = vcombine.low %v1492, %v1496
    %v2847 = vcombine.low %v1500, %v1504
    %v2848 = vcombine.low %v1508, %v1512
    %v2850 = vunpack.c.l.s4 1966171168
    %v2851 = vunpack.c.0.s8 %v2850
    %v2852 = vlaneseq
    %v2853 = vshrl.u32 %v2852, 7
    %v2854 = vsub.s32 %v2851, %v2853
    %v2855 = vrot.slane %v2845, %v2854
    %v2857 = vunpack.c.l.s4 1966171168
    %v2858 = vunpack.c.0.s8 %v2857
    %v2859 = vlaneseq
    %v2860 = vshrl.u32 %v2859, 7
    %v2861 = vsub.s32 %v2858, %v2860
    %v2862 = vrot.slane %v2846, %v2861
    %v2864 = vunpack.c.l.s4 1966171168
    %v2865 = vunpack.c.0.s8 %v2864
    %v2866 = vlaneseq
    %v2867 = vshrl.u32 %v2866, 7
    %v2868 = vsub.s32 %v2865, %v2867
    %v2869 = vrot.slane %v2847, %v2868
    %v2871 = vunpack.c.l.s4 1966171168
    %v2872 = vunpack.c.0.s8 %v2871
    %v2873 = vlaneseq
    %v2874 = vshrl.u32 %v2873, 7
    %v2875 = vsub.s32 %v2872, %v2874
    %v2876 = vrot.slane %v2848, %v2875
    %v2877 = vcombine.low %v2855, %v2862
    %v2878 = vcombine.low %v2869, %v2876
    %v2880 = vunpack.c.l.s4 1966171168
    %v2881 = vunpack.c.0.s8 %v2880
    %v2882 = vlaneseq
    %v2883 = vshrl.u32 %v2882, 7
    %v2884 = vsub.s32 %v2881, %v2883
    %v2885 = vrot.slane %v2877, %v2884
    %v2887 = vunpack.c.l.s4 1966171168
    %v2888 = vunpack.c.0.s8 %v2887
    %v2889 = vlaneseq
    %v2890 = vshrl.u32 %v2889, 7
    %v2891 = vsub.s32 %v2888, %v2890
    %v2892 = vrot.slane %v2878, %v2891
    %v2893 = vcombine.low %v2885, %v2892
    %v2894 = vcombine.low %v1516, %v1520
    %v2895 = vcombine.low %v1524, %v1528
    %v2896 = vcombine.low %v1532, %v1536
    %v2897 = vcombine.low %v1540, %v1544
    %v2899 = vunpack.c.l.s4 1966171168
    %v2900 = vunpack.c.0.s8 %v2899
    %v2901 = vlaneseq
    %v2902 = vshrl.u32 %v2901, 7
    %v2903 = vsub.s32 %v2900, %v2902
    %v2904 = vrot.slane %v2894, %v2903
    %v2906 = vunpack.c.l.s4 1966171168
    %v2907 = vunpack.c.0.s8 %v2906
    %v2908 = vlaneseq
    %v2909 = vshrl.u32 %v2908, 7
    %v2910 = vsub.s32 %v2907, %v2909
    %v2911 = vrot.slane %v2895, %v2910
    %v2913 = vunpack.c.l.s4 1966171168
    %v2914 = vunpack.c.0.s8 %v2913
    %v2915 = vlaneseq
    %v2916 = vshrl.u32 %v2915, 7
    %v2917 = vsub.s32 %v2914, %v2916
    %v2918 = vrot.slane %v2896, %v2917
    %v2920 = vunpack.c.l.s4 1966171168
    %v2921 = vunpack.c.0.s8 %v2920
    %v2922 = vlaneseq
    %v2923 = vshrl.u32 %v2922, 7
    %v2924 = vsub.s32 %v2921, %v2923
    %v2925 = vrot.slane %v2897, %v2924
    %v2926 = vcombine.low %v2904, %v2911
    %v2927 = vcombine.low %v2918, %v2925
    %v2929 = vunpack.c.l.s4 1966171168
    %v2930 = vunpack.c.0.s8 %v2929
    %v2931 = vlaneseq
    %v2932 = vshrl.u32 %v2931, 7
    %v2933 = vsub.s32 %v2930, %v2932
    %v2934 = vrot.slane %v2926, %v2933
    %v2936 = vunpack.c.l.s4 1966171168
    %v2937 = vunpack.c.0.s8 %v2936
    %v2938 = vlaneseq
    %v2939 = vshrl.u32 %v2938, 7
    %v2940 = vsub.s32 %v2937, %v2939
    %v2941 = vrot.slane %v2927, %v2940
    %v2942 = vcombine.low %v2934, %v2941
    %v2943 = vcombine.low %v1548, %v1552
    %v2944 = vcombine.low %v1556, %v1560
    %v2945 = vcombine.low %v1564, %v1568
    %v2946 = vcombine.low %v1572, %v1576
    %v2948 = vunpack.c.l.s4 1966171168
    %v2949 = vunpack.c.0.s8 %v2948
    %v2950 = vlaneseq
    %v2951 = vshrl.u32 %v2950, 7
    %v2952 = vsub.s32 %v2949, %v2951
    %v2953 = vrot.slane %v2943, %v2952
    %v2955 = vunpack.c.l.s4 1966171168
    %v2956 = vunpack.c.0.s8 %v2955
    %v2957 = vlaneseq
    %v2958 = vshrl.u32 %v2957, 7
    %v2959 = vsub.s32 %v2956, %v2958
    %v2960 = vrot.slane %v2944, %v2959
    %v2962 = vunpack.c.l.s4 1966171168
    %v2963 = vunpack.c.0.s8 %v2962
    %v2964 = vlaneseq
    %v2965 = vshrl.u32 %v2964, 7
    %v2966 = vsub.s32 %v2963, %v2965
    %v2967 = vrot.slane %v2945, %v2966
    %v2969 = vunpack.c.l.s4 1966171168
    %v2970 = vunpack.c.0.s8 %v2969
    %v2971 = vlaneseq
    %v2972 = vshrl.u32 %v2971, 7
    %v2973 = vsub.s32 %v2970, %v2972
    %v2974 = vrot.slane %v2946, %v2973
    %v2975 = vcombine.low %v2953, %v2960
    %v2976 = vcombine.low %v2967, %v2974
    %v2978 = vunpack.c.l.s4 1966171168
    %v2979 = vunpack.c.0.s8 %v2978
    %v2980 = vlaneseq
    %v2981 = vshrl.u32 %v2980, 7
    %v2982 = vsub.s32 %v2979, %v2981
    %v2983 = vrot.slane %v2975, %v2982
    %v2985 = vunpack.c.l.s4 1966171168
    %v2986 = vunpack.c.0.s8 %v2985
    %v2987 = vlaneseq
    %v2988 = vshrl.u32 %v2987, 7
    %v2989 = vsub.s32 %v2986, %v2988
    %v2990 = vrot.slane %v2976, %v2989
    %v2991 = vcombine.low %v2983, %v2990
    %v2992 = vcombine.low %v1580, %v1584
    %v2993 = vcombine.low %v1588, %v1592
    %v2994 = vcombine.low %v1596, %v1600
    %v2995 = vcombine.low %v1604, %v1608
    %v2997 = vunpack.c.l.s4 1966171168
    %v2998 = vunpack.c.0.s8 %v2997
    %v2999 = vlaneseq
    %v3000 = vshrl.u32 %v2999, 7
    %v3001 = vsub.s32 %v2998, %v3000
    %v3002 = vrot.slane %v2992, %v3001
    %v3004 = vunpack.c.l.s4 1966171168
    %v3005 = vunpack.c.0.s8 %v3004
    %v3006 = vlaneseq
    %v3007 = vshrl.u32 %v3006, 7
    %v3008 = vsub.s32 %v3005, %v3007
    %v3009 = vrot.slane %v2993, %v3008
    %v3011 = vunpack.c.l.s4 1966171168
    %v3012 = vunpack.c.0.s8 %v3011
    %v3013 = vlaneseq
    %v3014 = vshrl.u32 %v3013, 7
    %v3015 = vsub.s32 %v3012, %v3014
    %v3016 = vrot.slane %v2994, %v3015
    %v3018 = vunpack.c.l.s4 1966171168
    %v3019 = vunpack.c.0.s8 %v3018
    %v3020 = vlaneseq
    %v3021 = vshrl.u32 %v3020, 7
    %v3022 = vsub.s32 %v3019, %v3021
    %v3023 = vrot.slane %v2995, %v3022
    %v3024 = vcombine.low %v3002, %v3009
    %v3025 = vcombine.low %v3016, %v3023
    %v3027 = vunpack.c.l.s4 1966171168
    %v3028 = vunpack.c.0.s8 %v3027
    %v3029 = vlaneseq
    %v3030 = vshrl.u32 %v3029, 7
    %v3031 = vsub.s32 %v3028, %v3030
    %v3032 = vrot.slane %v3024, %v3031
    %v3034 = vunpack.c.l.s4 1966171168
    %v3035 = vunpack.c.0.s8 %v3034
    %v3036 = vlaneseq
    %v3037 = vshrl.u32 %v3036, 7
    %v3038 = vsub.s32 %v3035, %v3037
    %v3039 = vrot.slane %v3025, %v3038
    %v3040 = vcombine.low %v3032, %v3039
    %v3041 = vcombine.low %v1612, %v1616
    %v3042 = vcombine.low %v1620, %v1624
    %v3043 = vcombine.low %v1628, %v1632
    %v3044 = vcombine.low %v1636, %v1640
    %v3046 = vunpack.c.l.s4 1966171168
    %v3047 = vunpack.c.0.s8 %v3046
    %v3048 = vlaneseq
    %v3049 = vshrl.u32 %v3048, 7
    %v3050 = vsub.s32 %v3047, %v3049
    %v3051 = vrot.slane %v3041, %v3050
    %v3053 = vunpack.c.l.s4 1966171168
    %v3054 = vunpack.c.0.s8 %v3053
    %v3055 = vlaneseq
    %v3056 = vshrl.u32 %v3055, 7
    %v3057 = vsub.s32 %v3054, %v3056
    %v3058 = vrot.slane %v3042, %v3057
    %v3060 = vunpack.c.l.s4 1966171168
    %v3061 = vunpack.c.0.s8 %v3060
    %v3062 = vlaneseq
    %v3063 = vshrl.u32 %v3062, 7
    %v3064 = vsub.s32 %v3061, %v3063
    %v3065 = vrot.slane %v3043, %v3064
    %v3067 = vunpack.c.l.s4 1966171168
    %v3068 = vunpack.c.0.s8 %v3067
    %v3069 = vlaneseq
    %v3070 = vshrl.u32 %v3069, 7
    %v3071 = vsub.s32 %v3068, %v3070
    %v3072 = vrot.slane %v3044, %v3071
    %v3073 = vcombine.low %v3051, %v3058
    %v3074 = vcombine.low %v3065, %v3072
    %v3076 = vunpack.c.l.s4 1966171168
    %v3077 = vunpack.c.0.s8 %v3076
    %v3078 = vlaneseq
    %v3079 = vshrl.u32 %v3078, 7
    %v3080 = vsub.s32 %v3077, %v3079
    %v3081 = vrot.slane %v3073, %v3080
    %v3083 = vunpack.c.l.s4 1966171168
    %v3084 = vunpack.c.0.s8 %v3083
    %v3085 = vlaneseq
    %v3086 = vshrl.u32 %v3085, 7
    %v3087 = vsub.s32 %v3084, %v3086
    %v3088 = vrot.slane %v3074, %v3087
    %v3089 = vcombine.low %v3081, %v3088
    %v3090 = vcombine.low %v1644, %v1648
    %v3091 = vcombine.low %v1652, %v1656
    %v3092 = vcombine.low %v1660, %v1664
    %v3093 = vcombine.low %v1668, %v1672
    %v3095 = vunpack.c.l.s4 1966171168
    %v3096 = vunpack.c.0.s8 %v3095
    %v3097 = vlaneseq
    %v3098 = vshrl.u32 %v3097, 7
    %v3099 = vsub.s32 %v3096, %v3098
    %v3100 = vrot.slane %v3090, %v3099
    %v3102 = vunpack.c.l.s4 1966171168
    %v3103 = vunpack.c.0.s8 %v3102
    %v3104 = vlaneseq
    %v3105 = vshrl.u32 %v3104, 7
    %v3106 = vsub.s32 %v3103, %v3105
    %v3107 = vrot.slane %v3091, %v3106
    %v3109 = vunpack.c.l.s4 1966171168
    %v3110 = vunpack.c.0.s8 %v3109
    %v3111 = vlaneseq
    %v3112 = vshrl.u32 %v3111, 7
    %v3113 = vsub.s32 %v3110, %v3112
    %v3114 = vrot.slane %v3092, %v3113
    %v3116 = vunpack.c.l.s4 1966171168
    %v3117 = vunpack.c.0.s8 %v3116
    %v3118 = vlaneseq
    %v3119 = vshrl.u32 %v3118, 7
    %v3120 = vsub.s32 %v3117, %v3119
    %v3121 = vrot.slane %v3093, %v3120
    %v3122 = vcombine.low %v3100, %v3107
    %v3123 = vcombine.low %v3114, %v3121
    %v3125 = vunpack.c.l.s4 1966171168
    %v3126 = vunpack.c.0.s8 %v3125
    %v3127 = vlaneseq
    %v3128 = vshrl.u32 %v3127, 7
    %v3129 = vsub.s32 %v3126, %v3128
    %v3130 = vrot.slane %v3122, %v3129
    %v3132 = vunpack.c.l.s4 1966171168
    %v3133 = vunpack.c.0.s8 %v3132
    %v3134 = vlaneseq
    %v3135 = vshrl.u32 %v3134, 7
    %v3136 = vsub.s32 %v3133, %v3135
    %v3137 = vrot.slane %v3123, %v3136
    %v3138 = vcombine.low %v3130, %v3137
    %v3139 = vcombine.low %v1676, %v1680
    %v3140 = vcombine.low %v1684, %v1688
    %v3141 = vcombine.low %v1692, %v1696
    %v3142 = vcombine.low %v1700, %v1704
    %v3144 = vunpack.c.l.s4 1966171168
    %v3145 = vunpack.c.0.s8 %v3144
    %v3146 = vlaneseq
    %v3147 = vshrl.u32 %v3146, 7
    %v3148 = vsub.s32 %v3145, %v3147
    %v3149 = vrot.slane %v3139, %v3148
    %v3151 = vunpack.c.l.s4 1966171168
    %v3152 = vunpack.c.0.s8 %v3151
    %v3153 = vlaneseq
    %v3154 = vshrl.u32 %v3153, 7
    %v3155 = vsub.s32 %v3152, %v3154
    %v3156 = vrot.slane %v3140, %v3155
    %v3158 = vunpack.c.l.s4 1966171168
    %v3159 = vunpack.c.0.s8 %v3158
    %v3160 = vlaneseq
    %v3161 = vshrl.u32 %v3160, 7
    %v3162 = vsub.s32 %v3159, %v3161
    %v3163 = vrot.slane %v3141, %v3162
    %v3165 = vunpack.c.l.s4 1966171168
    %v3166 = vunpack.c.0.s8 %v3165
    %v3167 = vlaneseq
    %v3168 = vshrl.u32 %v3167, 7
    %v3169 = vsub.s32 %v3166, %v3168
    %v3170 = vrot.slane %v3142, %v3169
    %v3171 = vcombine.low %v3149, %v3156
    %v3172 = vcombine.low %v3163, %v3170
    %v3174 = vunpack.c.l.s4 1966171168
    %v3175 = vunpack.c.0.s8 %v3174
    %v3176 = vlaneseq
    %v3177 = vshrl.u32 %v3176, 7
    %v3178 = vsub.s32 %v3175, %v3177
    %v3179 = vrot.slane %v3171, %v3178
    %v3181 = vunpack.c.l.s4 1966171168
    %v3182 = vunpack.c.0.s8 %v3181
    %v3183 = vlaneseq
    %v3184 = vshrl.u32 %v3183, 7
    %v3185 = vsub.s32 %v3182, %v3184
    %v3186 = vrot.slane %v3172, %v3185
    %v3187 = vcombine.low %v3179, %v3186
    %v3188 = vcombine.low %v1708, %v1712
    %v3189 = vcombine.low %v1716, %v1720
    %v3190 = vcombine.low %v1724, %v1728
    %v3191 = vcombine.low %v1732, %v1736
    %v3193 = vunpack.c.l.s4 1966171168
    %v3194 = vunpack.c.0.s8 %v3193
    %v3195 = vlaneseq
    %v3196 = vshrl.u32 %v3195, 7
    %v3197 = vsub.s32 %v3194, %v3196
    %v3198 = vrot.slane %v3188, %v3197
    %v3200 = vunpack.c.l.s4 1966171168
    %v3201 = vunpack.c.0.s8 %v3200
    %v3202 = vlaneseq
    %v3203 = vshrl.u32 %v3202, 7
    %v3204 = vsub.s32 %v3201, %v3203
    %v3205 = vrot.slane %v3189, %v3204
    %v3207 = vunpack.c.l.s4 1966171168
    %v3208 = vunpack.c.0.s8 %v3207
    %v3209 = vlaneseq
    %v3210 = vshrl.u32 %v3209, 7
    %v3211 = vsub.s32 %v3208, %v3210
    %v3212 = vrot.slane %v3190, %v3211
    %v3214 = vunpack.c.l.s4 1966171168
    %v3215 = vunpack.c.0.s8 %v3214
    %v3216 = vlaneseq
    %v3217 = vshrl.u32 %v3216, 7
    %v3218 = vsub.s32 %v3215, %v3217
    %v3219 = vrot.slane %v3191, %v3218
    %v3220 = vcombine.low %v3198, %v3205
    %v3221 = vcombine.low %v3212, %v3219
    %v3223 = vunpack.c.l.s4 1966171168
    %v3224 = vunpack.c.0.s8 %v3223
    %v3225 = vlaneseq
    %v3226 = vshrl.u32 %v3225, 7
    %v3227 = vsub.s32 %v3224, %v3226
    %v3228 = vrot.slane %v3220, %v3227
    %v3230 = vunpack.c.l.s4 1966171168
    %v3231 = vunpack.c.0.s8 %v3230
    %v3232 = vlaneseq
    %v3233 = vshrl.u32 %v3232, 7
    %v3234 = vsub.s32 %v3231, %v3233
    %v3235 = vrot.slane %v3221, %v3234
    %v3236 = vcombine.low %v3228, %v3235
    %v3237 = vcombine.low %v1740, %v1744
    %v3238 = vcombine.low %v1748, %v1752
    %v3239 = vcombine.low %v1756, %v1760
    %v3240 = vcombine.low %v1764, %v1768
    %v3242 = vunpack.c.l.s4 1966171168
    %v3243 = vunpack.c.0.s8 %v3242
    %v3244 = vlaneseq
    %v3245 = vshrl.u32 %v3244, 7
    %v3246 = vsub.s32 %v3243, %v3245
    %v3247 = vrot.slane %v3237, %v3246
    %v3249 = vunpack.c.l.s4 1966171168
    %v3250 = vunpack.c.0.s8 %v3249
    %v3251 = vlaneseq
    %v3252 = vshrl.u32 %v3251, 7
    %v3253 = vsub.s32 %v3250, %v3252
    %v3254 = vrot.slane %v3238, %v3253
    %v3256 = vunpack.c.l.s4 1966171168
    %v3257 = vunpack.c.0.s8 %v3256
    %v3258 = vlaneseq
    %v3259 = vshrl.u32 %v3258, 7
    %v3260 = vsub.s32 %v3257, %v3259
    %v3261 = vrot.slane %v3239, %v3260
    %v3263 = vunpack.c.l.s4 1966171168
    %v3264 = vunpack.c.0.s8 %v3263
    %v3265 = vlaneseq
    %v3266 = vshrl.u32 %v3265, 7
    %v3267 = vsub.s32 %v3264, %v3266
    %v3268 = vrot.slane %v3240, %v3267
    %v3269 = vcombine.low %v3247, %v3254
    %v3270 = vcombine.low %v3261, %v3268
    %v3272 = vunpack.c.l.s4 1966171168
    %v3273 = vunpack.c.0.s8 %v3272
    %v3274 = vlaneseq
    %v3275 = vshrl.u32 %v3274, 7
    %v3276 = vsub.s32 %v3273, %v3275
    %v3277 = vrot.slane %v3269, %v3276
    %v3279 = vunpack.c.l.s4 1966171168
    %v3280 = vunpack.c.0.s8 %v3279
    %v3281 = vlaneseq
    %v3282 = vshrl.u32 %v3281, 7
    %v3283 = vsub.s32 %v3280, %v3282
    %v3284 = vrot.slane %v3270, %v3283
    %v3285 = vcombine.low %v3277, %v3284
    %v3286 = vcombine.low %v1772, %v1776
    %v3287 = vcombine.low %v1780, %v1784
    %v3288 = vcombine.low %v1788, %v1792
    %v3289 = vcombine.low %v1796, %v1800
    %v3291 = vunpack.c.l.s4 1966171168
    %v3292 = vunpack.c.0.s8 %v3291
    %v3293 = vlaneseq
    %v3294 = vshrl.u32 %v3293, 7
    %v3295 = vsub.s32 %v3292, %v3294
    %v3296 = vrot.slane %v3286, %v3295
    %v3298 = vunpack.c.l.s4 1966171168
    %v3299 = vunpack.c.0.s8 %v3298
    %v3300 = vlaneseq
    %v3301 = vshrl.u32 %v3300, 7
    %v3302 = vsub.s32 %v3299, %v3301
    %v3303 = vrot.slane %v3287, %v3302
    %v3305 = vunpack.c.l.s4 1966171168
    %v3306 = vunpack.c.0.s8 %v3305
    %v3307 = vlaneseq
    %v3308 = vshrl.u32 %v3307, 7
    %v3309 = vsub.s32 %v3306, %v3308
    %v3310 = vrot.slane %v3288, %v3309
    %v3312 = vunpack.c.l.s4 1966171168
    %v3313 = vunpack.c.0.s8 %v3312
    %v3314 = vlaneseq
    %v3315 = vshrl.u32 %v3314, 7
    %v3316 = vsub.s32 %v3313, %v3315
    %v3317 = vrot.slane %v3289, %v3316
    %v3318 = vcombine.low %v3296, %v3303
    %v3319 = vcombine.low %v3310, %v3317
    %v3321 = vunpack.c.l.s4 1966171168
    %v3322 = vunpack.c.0.s8 %v3321
    %v3323 = vlaneseq
    %v3324 = vshrl.u32 %v3323, 7
    %v3325 = vsub.s32 %v3322, %v3324
    %v3326 = vrot.slane %v3318, %v3325
    %v3328 = vunpack.c.l.s4 1966171168
    %v3329 = vunpack.c.0.s8 %v3328
    %v3330 = vlaneseq
    %v3331 = vshrl.u32 %v3330, 7
    %v3332 = vsub.s32 %v3329, %v3331
    %v3333 = vrot.slane %v3319, %v3332
    %v3334 = vcombine.low %v3326, %v3333
    %v3335 = vcombine.low %v1804, %v1808
    %v3336 = vcombine.low %v1812, %v1816
    %v3337 = vcombine.low %v1820, %v1824
    %v3338 = vcombine.low %v1828, %v1832
    %v3340 = vunpack.c.l.s4 1966171168
    %v3341 = vunpack.c.0.s8 %v3340
    %v3342 = vlaneseq
    %v3343 = vshrl.u32 %v3342, 7
    %v3344 = vsub.s32 %v3341, %v3343
    %v3345 = vrot.slane %v3335, %v3344
    %v3347 = vunpack.c.l.s4 1966171168
    %v3348 = vunpack.c.0.s8 %v3347
    %v3349 = vlaneseq
    %v3350 = vshrl.u32 %v3349, 7
    %v3351 = vsub.s32 %v3348, %v3350
    %v3352 = vrot.slane %v3336, %v3351
    %v3354 = vunpack.c.l.s4 1966171168
    %v3355 = vunpack.c.0.s8 %v3354
    %v3356 = vlaneseq
    %v3357 = vshrl.u32 %v3356, 7
    %v3358 = vsub.s32 %v3355, %v3357
    %v3359 = vrot.slane %v3337, %v3358
    %v3361 = vunpack.c.l.s4 1966171168
    %v3362 = vunpack.c.0.s8 %v3361
    %v3363 = vlaneseq
    %v3364 = vshrl.u32 %v3363, 7
    %v3365 = vsub.s32 %v3362, %v3364
    %v3366 = vrot.slane %v3338, %v3365
    %v3367 = vcombine.low %v3345, %v3352
    %v3368 = vcombine.low %v3359, %v3366
    %v3370 = vunpack.c.l.s4 1966171168
    %v3371 = vunpack.c.0.s8 %v3370
    %v3372 = vlaneseq
    %v3373 = vshrl.u32 %v3372, 7
    %v3374 = vsub.s32 %v3371, %v3373
    %v3375 = vrot.slane %v3367, %v3374
    %v3377 = vunpack.c.l.s4 1966171168
    %v3378 = vunpack.c.0.s8 %v3377
    %v3379 = vlaneseq
    %v3380 = vshrl.u32 %v3379, 7
    %v3381 = vsub.s32 %v3378, %v3380
    %v3382 = vrot.slane %v3368, %v3381
    %v3383 = vcombine.low %v3375, %v3382
    %v3384 = vcombine.low %v1836, %v1840
    %v3385 = vcombine.low %v1844, %v1848
    %v3386 = vcombine.low %v1852, %v1856
    %v3387 = vcombine.low %v1860, %v1864
    %v3389 = vunpack.c.l.s4 1966171168
    %v3390 = vunpack.c.0.s8 %v3389
    %v3391 = vlaneseq
    %v3392 = vshrl.u32 %v3391, 7
    %v3393 = vsub.s32 %v3390, %v3392
    %v3394 = vrot.slane %v3384, %v3393
    %v3396 = vunpack.c.l.s4 1966171168
    %v3397 = vunpack.c.0.s8 %v3396
    %v3398 = vlaneseq
    %v3399 = vshrl.u32 %v3398, 7
    %v3400 = vsub.s32 %v3397, %v3399
    %v3401 = vrot.slane %v3385, %v3400
    %v3403 = vunpack.c.l.s4 1966171168
    %v3404 = vunpack.c.0.s8 %v3403
    %v3405 = vlaneseq
    %v3406 = vshrl.u32 %v3405, 7
    %v3407 = vsub.s32 %v3404, %v3406
    %v3408 = vrot.slane %v3386, %v3407
    %v3410 = vunpack.c.l.s4 1966171168
    %v3411 = vunpack.c.0.s8 %v3410
    %v3412 = vlaneseq
    %v3413 = vshrl.u32 %v3412, 7
    %v3414 = vsub.s32 %v3411, %v3413
    %v3415 = vrot.slane %v3387, %v3414
    %v3416 = vcombine.low %v3394, %v3401
    %v3417 = vcombine.low %v3408, %v3415
    %v3419 = vunpack.c.l.s4 1966171168
    %v3420 = vunpack.c.0.s8 %v3419
    %v3421 = vlaneseq
    %v3422 = vshrl.u32 %v3421, 7
    %v3423 = vsub.s32 %v3420, %v3422
    %v3424 = vrot.slane %v3416, %v3423
    %v3426 = vunpack.c.l.s4 1966171168
    %v3427 = vunpack.c.0.s8 %v3426
    %v3428 = vlaneseq
    %v3429 = vshrl.u32 %v3428, 7
    %v3430 = vsub.s32 %v3427, %v3429
    %v3431 = vrot.slane %v3417, %v3430
    %v3432 = vcombine.low %v3424, %v3431
    %3433 = vset.pattern.permute.xlu0 0
    %3434 = vperm.xlu0 %3433, %v1913
    %v3435 = vpop.permute.xlu0 %3434
    %3436 = vset.pattern.permute.xlu0 0
    %3437 = vperm.xlu0 %3436, %v1962
    %v3438 = vpop.permute.xlu0 %3437
    %3439 = vset.pattern.permute.xlu0 0
    %3440 = vperm.xlu0 %3439, %v2011
    %v3441 = vpop.permute.xlu0 %3440
    %3442 = vset.pattern.permute.xlu0 0
    %3443 = vperm.xlu0 %3442, %v2060
    %v3444 = vpop.permute.xlu0 %3443
    %3445 = vset.pattern.permute.xlu0 0
    %3446 = vperm.xlu0 %3445, %v2109
    %v3447 = vpop.permute.xlu0 %3446
    %3448 = vset.pattern.permute.xlu0 0
    %3449 = vperm.xlu0 %3448, %v2158
    %v3450 = vpop.permute.xlu0 %3449
    %3451 = vset.pattern.permute.xlu0 0
    %3452 = vperm.xlu0 %3451, %v2207
    %v3453 = vpop.permute.xlu0 %3452
    %3454 = vset.pattern.permute.xlu0 0
    %3455 = vperm.xlu0 %3454, %v2256
    %v3456 = vpop.permute.xlu0 %3455
    %3457 = vset.pattern.permute.xlu0 0
    %3458 = vperm.xlu0 %3457, %v2305
    %v3459 = vpop.permute.xlu0 %3458
    %3460 = vset.pattern.permute.xlu0 0
    %3461 = vperm.xlu0 %3460, %v2354
    %v3462 = vpop.permute.xlu0 %3461
    %3463 = vset.pattern.permute.xlu0 0
    %3464 = vperm.xlu0 %3463, %v2403
    %v3465 = vpop.permute.xlu0 %3464
    %3466 = vset.pattern.permute.xlu0 0
    %3467 = vperm.xlu0 %3466, %v2452
    %v3468 = vpop.permute.xlu0 %3467
    %3469 = vset.pattern.permute.xlu0 0
    %3470 = vperm.xlu0 %3469, %v2501
    %v3471 = vpop.permute.xlu0 %3470
    %3472 = vset.pattern.permute.xlu0 0
    %3473 = vperm.xlu0 %3472, %v2550
    %v3474 = vpop.permute.xlu0 %3473
    %3475 = vset.pattern.permute.xlu0 0
    %3476 = vperm.xlu0 %3475, %v2599
    %v3477 = vpop.permute.xlu0 %3476
    %3478 = vset.pattern.permute.xlu0 0
    %3479 = vperm.xlu0 %3478, %v2648
    %v3480 = vpop.permute.xlu0 %3479
    %3481 = vset.pattern.permute.xlu0 0
    %3482 = vperm.xlu0 %3481, %v2697
    %v3483 = vpop.permute.xlu0 %3482
    %3484 = vset.pattern.permute.xlu0 0
    %3485 = vperm.xlu0 %3484, %v2746
    %v3486 = vpop.permute.xlu0 %3485
    %3487 = vset.pattern.permute.xlu0 0
    %3488 = vperm.xlu0 %3487, %v2795
    %v3489 = vpop.permute.xlu0 %3488
    %3490 = vset.pattern.permute.xlu0 0
    %3491 = vperm.xlu0 %3490, %v2844
    %v3492 = vpop.permute.xlu0 %3491
    %3493 = vset.pattern.permute.xlu0 0
    %3494 = vperm.xlu0 %3493, %v2893
    %v3495 = vpop.permute.xlu0 %3494
    %3496 = vset.pattern.permute.xlu0 0
    %3497 = vperm.xlu0 %3496, %v2942
    %v3498 = vpop.permute.xlu0 %3497
    %3499 = vset.pattern.permute.xlu0 0
    %3500 = vperm.xlu0 %3499, %v2991
    %v3501 = vpop.permute.xlu0 %3500
    %3502 = vset.pattern.permute.xlu0 0
    %3503 = vperm.xlu0 %3502, %v3040
    %v3504 = vpop.permute.xlu0 %3503
    %3505 = vset.pattern.permute.xlu0 0
    %3506 = vperm.xlu0 %3505, %v3089
    %v3507 = vpop.permute.xlu0 %3506
    %3508 = vset.pattern.permute.xlu0 0
    %3509 = vperm.xlu0 %3508, %v3138
    %v3510 = vpop.permute.xlu0 %3509
    %3511 = vset.pattern.permute.xlu0 0
    %3512 = vperm.xlu0 %3511, %v3187
    %v3513 = vpop.permute.xlu0 %3512
    %3514 = vset.pattern.permute.xlu0 0
    %3515 = vperm.xlu0 %3514, %v3236
    %v3516 = vpop.permute.xlu0 %3515
    %3517 = vset.pattern.permute.xlu0 0
    %3518 = vperm.xlu0 %3517, %v3285
    %v3519 = vpop.permute.xlu0 %3518
    %3520 = vset.pattern.permute.xlu0 0
    %3521 = vperm.xlu0 %3520, %v3334
    %v3522 = vpop.permute.xlu0 %3521
    %3523 = vset.pattern.permute.xlu0 0
    %3524 = vperm.xlu0 %3523, %v3383
    %v3525 = vpop.permute.xlu0 %3524
    %3526 = vset.pattern.permute.xlu0 0
    %3527 = vperm.xlu0 %3526, %v3432
    %v3528 = vpop.permute.xlu0 %3527
    %v3529 = vlaneseq
    %v3530 = vand.u32 %v3529, 127
    %v3531 = vlaneseq
    %v3532 = vshrl.u32 %v3531, 7
    %v3533 = vsub.s32 %v3530, %v3532
    %v3534 = vrot.slane %v3435, %v3533
    %v3535 = vadd.s32 %v3530, 4294967288
    %v3536 = vlaneseq
    %v3537 = vshrl.u32 %v3536, 7
    %v3538 = vsub.s32 %v3535, %v3537
    %v3539 = vrot.slane %v3438, %v3538
    %vm3540 = vcmask 130112
    %v3541 = vsel %vm3540, %v3539, %v3534
    %v3542 = vadd.s32 %v3530, 4294967280
    %v3543 = vlaneseq
    %v3544 = vshrl.u32 %v3543, 7
    %v3545 = vsub.s32 %v3542, %v3544
    %v3546 = vrot.slane %v3441, %v3545
    %vm3547 = vcmask 195712
    %v3548 = vsel %vm3547, %v3546, %v3541
    %v3549 = vadd.s32 %v3530, 4294967272
    %v3550 = vlaneseq
    %v3551 = vshrl.u32 %v3550, 7
    %v3552 = vsub.s32 %v3549, %v3551
    %v3553 = vrot.slane %v3444, %v3552
    %vm3554 = vcmask 261312
    %v3555 = vsel %vm3554, %v3553, %v3548
    %v3556 = vadd.s32 %v3530, 4294967264
    %v3557 = vlaneseq
    %v3558 = vshrl.u32 %v3557, 7
    %v3559 = vsub.s32 %v3556, %v3558
    %v3560 = vrot.slane %v3447, %v3559
    %vm3561 = vcmask 326912
    %v3562 = vsel %vm3561, %v3560, %v3555
    %v3563 = vadd.s32 %v3530, 4294967256
    %v3564 = vlaneseq
    %v3565 = vshrl.u32 %v3564, 7
    %v3566 = vsub.s32 %v3563, %v3565
    %v3567 = vrot.slane %v3450, %v3566
    %vm3568 = vcmask 392512
    %v3569 = vsel %vm3568, %v3567, %v3562
    %v3570 = vadd.s32 %v3530, 4294967248
    %v3571 = vlaneseq
    %v3572 = vshrl.u32 %v3571, 7
    %v3573 = vsub.s32 %v3570, %v3572
    %v3574 = vrot.slane %v3453, %v3573
    %vm3575 = vcmask 458112
    %v3576 = vsel %vm3575, %v3574, %v3569
    %v3577 = vadd.s32 %v3530, 4294967240
    %v3578 = vlaneseq
    %v3579 = vshrl.u32 %v3578, 7
    %v3580 = vsub.s32 %v3577, %v3579
    %v3581 = vrot.slane %v3456, %v3580
    %vm3582 = vcmask 523712
    %v3583 = vsel %vm3582, %v3581, %v3576
    %v3584 = vadd.s32 %v3530, 4294967232
    %v3585 = vlaneseq
    %v3586 = vshrl.u32 %v3585, 7
    %v3587 = vsub.s32 %v3584, %v3586
    %v3588 = vrot.slane %v3459, %v3587
    %vm3589 = vcmask 589312
    %v3590 = vsel %vm3589, %v3588, %v3583
    %v3591 = vadd.s32 %v3530, 4294967224
    %v3592 = vlaneseq
    %v3593 = vshrl.u32 %v3592, 7
    %v3594 = vsub.s32 %v3591, %v3593
    %v3595 = vrot.slane %v3462, %v3594
    %vm3596 = vcmask 654912
    %v3597 = vsel %vm3596, %v3595, %v3590
    %v3598 = vadd.s32 %v3530, 4294967216
    %v3599 = vlaneseq
    %v3600 = vshrl.u32 %v3599, 7
    %v3601 = vsub.s32 %v3598, %v3600
    %v3602 = vrot.slane %v3465, %v3601
    %vm3603 = vcmask 720512
    %v3604 = vsel %vm3603, %v3602, %v3597
    %v3605 = vadd.s32 %v3530, 4294967208
    %v3606 = vlaneseq
    %v3607 = vshrl.u32 %v3606, 7
    %v3608 = vsub.s32 %v3605, %v3607
    %v3609 = vrot.slane %v3468, %v3608
    %vm3610 = vcmask 786112
    %v3611 = vsel %vm3610, %v3609, %v3604
    %v3612 = vadd.s32 %v3530, 4294967200
    %v3613 = vlaneseq
    %v3614 = vshrl.u32 %v3613, 7
    %v3615 = vsub.s32 %v3612, %v3614
    %v3616 = vrot.slane %v3471, %v3615
    %vm3617 = vcmask 851712
    %v3618 = vsel %vm3617, %v3616, %v3611
    %v3619 = vadd.s32 %v3530, 4294967192
    %v3620 = vlaneseq
    %v3621 = vshrl.u32 %v3620, 7
    %v3622 = vsub.s32 %v3619, %v3621
    %v3623 = vrot.slane %v3474, %v3622
    %vm3624 = vcmask 917312
    %v3625 = vsel %vm3624, %v3623, %v3618
    %v3626 = vadd.s32 %v3530, 4294967184
    %v3627 = vlaneseq
    %v3628 = vshrl.u32 %v3627, 7
    %v3629 = vsub.s32 %v3626, %v3628
    %v3630 = vrot.slane %v3477, %v3629
    %vm3631 = vcmask 982912
    %v3632 = vsel %vm3631, %v3630, %v3625
    %v3633 = vadd.s32 %v3530, 4294967176
    %v3634 = vlaneseq
    %v3635 = vshrl.u32 %v3634, 7
    %v3636 = vsub.s32 %v3633, %v3635
    %v3637 = vrot.slane %v3480, %v3636
    %vm3638 = vcmask 1048512
    %v3639 = vsel %vm3638, %v3637, %v3632
    %v3640 = vlaneseq
    %v3641 = vshrl.u32 %v3640, 7
    %v3642 = vsub.s32 %v3530, %v3641
    %v3643 = vrot.slane %v3483, %v3642
    %v3644 = vlaneseq
    %v3645 = vshrl.u32 %v3644, 7
    %v3646 = vsub.s32 %v3535, %v3645
    %v3647 = vrot.slane %v3486, %v3646
    %v3648 = vsel %vm3540, %v3647, %v3643
    %v3649 = vlaneseq
    %v3650 = vshrl.u32 %v3649, 7
    %v3651 = vsub.s32 %v3542, %v3650
    %v3652 = vrot.slane %v3489, %v3651
    %v3653 = vsel %vm3547, %v3652, %v3648
    %v3654 = vlaneseq
    %v3655 = vshrl.u32 %v3654, 7
    %v3656 = vsub.s32 %v3549, %v3655
    %v3657 = vrot.slane %v3492, %v3656
    %v3658 = vsel %vm3554, %v3657, %v3653
    %v3659 = vlaneseq
    %v3660 = vshrl.u32 %v3659, 7
    %v3661 = vsub.s32 %v3556, %v3660
    %v3662 = vrot.slane %v3495, %v3661
    %v3663 = vsel %vm3561, %v3662, %v3658
    %v3664 = vlaneseq
    %v3665 = vshrl.u32 %v3664, 7
    %v3666 = vsub.s32 %v3563, %v3665
    %v3667 = vrot.slane %v3498, %v3666
    %v3668 = vsel %vm3568, %v3667, %v3663
    %v3669 = vlaneseq
    %v3670 = vshrl.u32 %v3669, 7
    %v3671 = vsub.s32 %v3570, %v3670
    %v3672 = vrot.slane %v3501, %v3671
    %v3673 = vsel %vm3575, %v3672, %v3668
    %v3674 = vlaneseq
    %v3675 = vshrl.u32 %v3674, 7
    %v3676 = vsub.s32 %v3577, %v3675
    %v3677 = vrot.slane %v3504, %v3676
    %v3678 = vsel %vm3582, %v3677, %v3673
    %v3679 = vlaneseq
    %v3680 = vshrl.u32 %v3679, 7
    %v3681 = vsub.s32 %v3584, %v3680
    %v3682 = vrot.slane %v3507, %v3681
    %v3683 = vsel %vm3589, %v3682, %v3678
    %v3684 = vlaneseq
    %v3685 = vshrl.u32 %v3684, 7
    %v3686 = vsub.s32 %v3591, %v3685
    %v3687 = vrot.slane %v3510, %v3686
    %v3688 = vsel %vm3596, %v3687, %v3683
    %v3689 = vlaneseq
    %v3690 = vshrl.u32 %v3689, 7
    %v3691 = vsub.s32 %v3598, %v3690
    %v3692 = vrot.slane %v3513, %v3691
    %v3693 = vsel %vm3603, %v3692, %v3688
    %v3694 = vlaneseq
    %v3695 = vshrl.u32 %v3694, 7
    %v3696 = vsub.s32 %v3605, %v3695
    %v3697 = vrot.slane %v3516, %v3696
    %v3698 = vsel %vm3610, %v3697, %v3693
    %v3699 = vlaneseq
    %v3700 = vshrl.u32 %v3699, 7
    %v3701 = vsub.s32 %v3612, %v3700
    %v3702 = vrot.slane %v3519, %v3701
    %v3703 = vsel %vm3617, %v3702, %v3698
    %v3704 = vlaneseq
    %v3705 = vshrl.u32 %v3704, 7
    %v3706 = vsub.s32 %v3619, %v3705
    %v3707 = vrot.slane %v3522, %v3706
    %v3708 = vsel %vm3624, %v3707, %v3703
    %v3709 = vlaneseq
    %v3710 = vshrl.u32 %v3709, 7
    %v3711 = vsub.s32 %v3626, %v3710
    %v3712 = vrot.slane %v3525, %v3711
    %v3713 = vsel %vm3631, %v3712, %v3708
    %v3714 = vlaneseq
    %v3715 = vshrl.u32 %v3714, 7
    %v3716 = vsub.s32 %v3633, %v3715
    %v3717 = vrot.slane %v3528, %v3716
    %v3718 = vsel %vm3638, %v3717, %v3713
    %v3719 = vcombine.low %v3639, %v3718
    %v3721 = vunpack.c.l.s4 1966171168
    %v3722 = vunpack.c.0.s8 %v3721
    %v3723 = vlaneseq
    %v3724 = vshrl.u32 %v3723, 7
    %v3725 = vsub.s32 %v3722, %v3724
    %v3726 = vrot.slane %v3719, %v3725
    %v3728 = vunpack.c.l.s4 1966171168
    %v3729 = vunpack.c.0.s8 %v3728
    %v3730 = vlaneseq
    %v3731 = vshrl.u32 %v3730, 7
    %v3732 = vsub.s32 %v3729, %v3731
    %v3733 = vrot.slane %v3726, %v3732
    %v3735 = vlaneseq
    %vm3736 = vcmp.ge.s32.totalorder %v3735, 0
    %vm3737 = vcmp.lt.s32.totalorder %v3735, 256
    %vm3738 = vmand %vm3736, %vm3737
    %3739 = vst.msk [vmem:[#allocation3] sm:$0x3] %vm3738, %v3733
    // Predicated region
    $region30: #{tpu_custom_call.1} parent=1 // pred_check
      _
    $region31: #{tpu_custom_call.1} parent=1 // pred_check_branch
      %3741 = sbr.rel (0) target = $region33
    $region32: #{tpu_custom_call.1} parent=1 // pred_region
      %s3743 = ssub.s32 32, 32
      %3744 = vsyncadd [#allocation4], %s3743
      %s3746 = sshll.u32 [#allocation3], 4
      %s3747 = int_to_ptr.vmem [resolvable:$true] %s3746
      %3749 = dma.vmem_to_hbm [thread:$0]  %s3747, 32, %s7, [#allocation4]
    $region33: #{tpu_custom_call.1} parent=1 // pred_fallthru
      _
    // Predicated region
    $region34: #{tpu_custom_call.1} parent=1 // pred_check
      _
    $region35: #{tpu_custom_call.1} parent=1 // pred_check_branch
      %3751 = sbr.rel (0) target = $region37
    $region36: #{tpu_custom_call.1} parent=1 // pred_region
      %3752 = dma.done [#allocation4], 32
    $region37: #{tpu_custom_call.1} parent=1 // pred_fallthru
      _
    %3753 = vsyncpa [#allocation4], 1

</llo_original>
